<compile_context>
chip_gen: v7x
topology: tpu7x:2x2x1
jax: 0.10.0
libtpu: 0.0.40
codegen_flags: <defaults>
</compile_context>

<pallas_src>
from functools import partial

import jax
import jax.numpy as jnp
from jax.experimental import pallas as pl
from jax.experimental.pallas import tpu as pltpu


# ----------------------------- in-kernel helpers -----------------------------

def _layernorm(x, gamma, beta, eps=1e-5):
    # x: (..., D) f32; gamma/beta: (1, D) f32  (PyTorch LayerNorm default eps).
    mu = jnp.mean(x, axis=-1, keepdims=True)
    var = jnp.mean((x - mu) ** 2, axis=-1, keepdims=True)
    return (x - mu) * jax.lax.rsqrt(var + eps) * gamma + beta


def _gelu_exact(x):
    # PyTorch nn.GELU() default: exact erf-based GELU.
    return 0.5 * x * (1.0 + jax.lax.erf(x * (1.0 / jnp.sqrt(2.0).astype(x.dtype))))


# ------------------------- fused whole-stack kernel ---------------------------
# grid = (B, depth); one invocation = one transformer layer applied to one
# batch element.  The output block (index depends only on b) stays VMEM
# resident across the depth axis and carries the activation between layers.

def stack_kernel(x_ref, ln1_g_ref, ln1_b_ref, wqkv_ref, wo_ref, bo_ref,
                 ln2_g_ref, ln2_b_ref, w1_ref, b1_ref, w2_ref, b2_ref,
                 o_ref, *, heads, dim_head):
    f32, bf16 = jnp.float32, jnp.bfloat16
    inner = heads * dim_head
    l = pl.program_id(1)                       # layer index (sequential axis)

    # Layer 0: seed the carried activation from the input block.
    @pl.when(l == 0)
    def _():
        o_ref[...] = x_ref[...]

    x = o_ref[0]                               # (N, D) f32 carried activation

    # -------- Attention block: PreNorm -> fused QKV -> MHSA -> out proj -> residual
    xn = _layernorm(x, ln1_g_ref[0], ln1_b_ref[0])
    # Single lane-dense projection: (N, D) @ (D, 3*inner), bf16 operands, f32 acc.
    qkv = jnp.dot(xn.astype(bf16), wqkv_ref[0], preferred_element_type=f32)

    scale = dim_head ** (-0.5)
    q = qkv[:, 0 * inner:1 * inner] * scale    # scale folded into q (N*inner muls)
    k = qkv[:, 1 * inner:2 * inner]
    v = qkv[:, 2 * inner:3 * inner]

    # Head split: H static lane slices stacked onto a leading batch axis
    # (relayout only; all MXU work stays dense).
    def split_heads(t):                        # (N, inner) -> (H, N, dh)
        return jnp.stack(
            [t[:, h * dim_head:(h + 1) * dim_head] for h in range(heads)], axis=0)

    qh, kh, vh = split_heads(q), split_heads(k), split_heads(v)

    dots = jnp.einsum("hnd,hmd->hnm", qh.astype(bf16), kh.astype(bf16),
                      preferred_element_type=f32)              # (H, N, N) f32
    dots = dots - jnp.max(dots, axis=-1, keepdims=True)
    e = jnp.exp(dots)
    attn = e * pl.reciprocal(jnp.sum(e, axis=-1, keepdims=True), approx=True)

    ctx = jnp.einsum("hnm,hmd->hnd", attn.astype(bf16), vh.astype(bf16),
                     preferred_element_type=f32)               # (H, N, dh) f32

    # Merge heads back to a lane-dense (N, inner) slab and do ONE dense
    # output projection with contraction K = inner (same math as concat+Linear).
    merged = jnp.concatenate([ctx[h] for h in range(heads)], axis=-1)
    attn_out = jnp.dot(merged.astype(bf16), wo_ref[0],
                       preferred_element_type=f32) + bo_ref[0]
    x = attn_out + x                                           # residual

    # -------- FeedForward block: PreNorm -> Linear -> GELU -> Linear -> residual
    xn = _layernorm(x, ln2_g_ref[0], ln2_b_ref[0])
    h1 = jnp.dot(xn.astype(bf16), w1_ref[0], preferred_element_type=f32) + b1_ref[0]
    h1 = _gelu_exact(h1)
    ff = jnp.dot(h1.astype(bf16), w2_ref[0], preferred_element_type=f32) + b2_ref[0]

    o_ref[0] = (ff + x).astype(o_ref.dtype)                    # residual / carry


# ------------------------------- pallas_call glue ------------------------------

def _vmem_limit_bytes():
    # Per-generation budget: ~75% of physical VMEM (≈48 MiB on v7x's 64 MiB,
    # ≈96 MiB on v5e/v6e's 128 MiB), capped at 100 MiB.
    try:
        phys = int(pltpu.get_tpu_info().vmem_capacity_bytes)
    except Exception:
        phys = 64 * 1024 * 1024        # conservative fallback (v7x physical)
    return min((phys * 3) // 4, 100 * 1024 * 1024)


def transformer_forward(x, params, *, heads, dim_head):
    B, N, D = x.shape
    depth = params["wqkv_t"].shape[0]
    inner = heads * dim_head
    mlp_dim = params["w1_t"].shape[-1]

    def act_map(b, l):   # activation blocks: depend only on batch coordinate
        return (b, 0, 0)

    def layer_map(b, l):  # weight blocks: depend only on layer coordinate
        return (l, 0, 0)

    in_specs = [
        pl.BlockSpec((1, N, D), act_map),              # x
        pl.BlockSpec((1, 1, D), layer_map),            # ln1 gamma
        pl.BlockSpec((1, 1, D), layer_map),            # ln1 beta
        pl.BlockSpec((1, D, 3 * inner), layer_map),    # wqkv^T  (bf16)
        pl.BlockSpec((1, inner, D), layer_map),        # wo^T    (bf16)
        pl.BlockSpec((1, 1, D), layer_map),            # bo
        pl.BlockSpec((1, 1, D), layer_map),            # ln2 gamma
        pl.BlockSpec((1, 1, D), layer_map),            # ln2 beta
        pl.BlockSpec((1, D, mlp_dim), layer_map),      # w1^T    (bf16)
        pl.BlockSpec((1, 1, mlp_dim), layer_map),      # b1
        pl.BlockSpec((1, mlp_dim, D), layer_map),      # w2^T    (bf16)
        pl.BlockSpec((1, 1, D), layer_map),            # b2
    ]

    kernel = partial(stack_kernel, heads=heads, dim_head=dim_head)
    return pl.pallas_call(
        kernel,
        out_shape=jax.ShapeDtypeStruct((B, N, D), jnp.float32),
        grid=(B, depth),                               # depth innermost: carry axis
        in_specs=in_specs,
        out_specs=pl.BlockSpec((1, N, D), act_map),    # resident across depth
        compiler_params=pltpu.CompilerParams(
            dimension_semantics=("parallel", "arbitrary"),
            vmem_limit_bytes=_vmem_limit_bytes(),
        ),
    )(x, params["ln1_g"], params["ln1_b"], params["wqkv_t"], params["wo_t"],
      params["bo"], params["ln2_g"], params["ln2_b"], params["w1_t"],
      params["b1"], params["w2_t"], params["b2"])


# --------------------------- pure-JAX reference check ---------------------------
# Mirrors the kernel's dtype discipline (bf16 matmul operands, f32 accumulation)
# but uses the canonical per-batch concat-heads formulation with the scale
# applied to the scores, cross-checking the kernel's fused-projection /
# scale-on-q / merged-output-projection decomposition.

def transformer_reference(x, params, *, heads, dim_head):
    bf16, f32 = jnp.bfloat16, jnp.float32
    inner = heads * dim_head
    scale = dim_head ** (-0.5)
    depth = params["wqkv_t"].shape[0]
    B, N, _ = x.shape
    for d in range(depth):
        # Attention block
        xn = _layernorm(x, params["ln1_g"][d], params["ln1_b"][d])
        qkv = jnp.dot(xn.astype(bf16), params["wqkv_t"][d], preferred_element_type=f32)
        q, k, v = jnp.split(qkv, 3, axis=-1)

        def to_heads(t):
            return t.reshape(B, N, heads, dim_head).transpose(0, 2, 1, 3)

        q, k, v = map(to_heads, (q, k, v))
        dots = jnp.einsum("bhnd,bhmd->bhnm", q.astype(bf16), k.astype(bf16),
                          preferred_element_type=f32) * scale
        attn = jax.nn.softmax(dots, axis=-1)
        out = jnp.einsum("bhnm,bhmd->bhnd", attn.astype(bf16), v.astype(bf16),
                         preferred_element_type=f32)
        out = out.transpose(0, 2, 1, 3).reshape(B, N, inner)
        out = jnp.dot(out.astype(bf16), params["wo_t"][d],
                      preferred_element_type=f32) + params["bo"][d]
        x = out + x
        # FeedForward block
        xn = _layernorm(x, params["ln2_g"][d], params["ln2_b"][d])
        h = _gelu_exact(jnp.dot(xn.astype(bf16), params["w1_t"][d],
                                preferred_element_type=f32) + params["b1"][d])
        x = jnp.dot(h.astype(bf16), params["w2_t"][d],
                    preferred_element_type=f32) + params["b2"][d] + x
    return x


# ----------------------------------- params -----------------------------------
# Weights are stored ONCE in the kernel's layout: depth-stacked, transposed so
# y = x @ W^T, matmul weights in bf16 (half the stream/VMEM bytes), LN/bias f32.
# (Assumes the multi-head `project_out=True` configuration, i.e. to_out is a
# Linear — true whenever heads > 1 or dim_head != dim, as in the test config.)

def init_params(key, *, dim, depth, heads, dim_head, mlp_dim):
    inner = heads * dim_head
    ks = jax.random.split(key, 9)

    def w_bf16(k, shape):
        return (0.02 * jax.random.normal(k, shape, jnp.float32)).astype(jnp.bfloat16)

    return {
        # LayerNorm affine params perturbed from identity so the test exercises them.
        "ln1_g": 1.0 + 0.05 * jax.random.normal(ks[0], (depth, 1, dim), jnp.float32),
        "ln1_b": 0.05 * jax.random.normal(ks[1], (depth, 1, dim), jnp.float32),
        "wqkv_t": w_bf16(ks[2], (depth, dim, 3 * inner)),
        "wo_t": w_bf16(ks[3], (depth, inner, dim)),
        "bo": 0.01 * jax.random.normal(ks[4], (depth, 1, dim), jnp.float32),
        "ln2_g": 1.0 + 0.05 * jax.random.normal(ks[5], (depth, 1, dim), jnp.float32),
        "ln2_b": 0.05 * jax.random.normal(ks[6], (depth, 1, dim), jnp.float32),
        "w1_t": w_bf16(ks[7], (depth, dim, mlp_dim)),
        "b1": jnp.zeros((depth, 1, mlp_dim), jnp.float32),
        "w2_t": w_bf16(ks[8], (depth, mlp_dim, dim)),
        "b2": jnp.zeros((depth, 1, dim), jnp.float32),
    }


# ------------------------------------ main -------------------------------------

if __name__ == "__main__":
    B, N, DIM = 2, 8, 32
    DEPTH, HEADS, DIM_HEAD, MLP_DIM = 2, 4, 8, 64

    key = jax.random.PRNGKey(0)
    kx, kp = jax.random.split(key)
    x = jax.random.normal(kx, (B, N, DIM), jnp.float32)
    params = init_params(kp, dim=DIM, depth=DEPTH, heads=HEADS,
                         dim_head=DIM_HEAD, mlp_dim=MLP_DIM)

    fwd = jax.jit(partial(transformer_forward, heads=HEADS, dim_head=DIM_HEAD))
    out = jax.block_until_ready(fwd(x, params))

    ref = transformer_reference(x, params, heads=HEADS, dim_head=DIM_HEAD)
    assert out.shape == (B, N, DIM)
    max_diff = float(jnp.max(jnp.abs(out - ref)))
    # bf16 matmul operands + approx reciprocal in softmax -> loosened tolerance.
    assert jnp.allclose(out, ref, rtol=2e-2, atol=2e-2), f"max abs diff = {max_diff}"

    print("KERNEL_OK")
</pallas_src>

<mosaic_0001>
module attributes {stable_mosaic.version = 11 : i64} {
  func.func @stack_kernel(%arg0: i32, %arg1: i32, %arg2: memref<1x8x32xf32, #tpu.memory_space<vmem>>, %arg3: memref<1x1x32xf32, #tpu.memory_space<vmem>>, %arg4: memref<1x1x32xf32, #tpu.memory_space<vmem>>, %arg5: memref<1x32x96xbf16, #tpu.memory_space<vmem>>, %arg6: memref<1x32x32xbf16, #tpu.memory_space<vmem>>, %arg7: memref<1x1x32xf32, #tpu.memory_space<vmem>>, %arg8: memref<1x1x32xf32, #tpu.memory_space<vmem>>, %arg9: memref<1x1x32xf32, #tpu.memory_space<vmem>>, %arg10: memref<1x32x64xbf16, #tpu.memory_space<vmem>>, %arg11: memref<1x1x64xf32, #tpu.memory_space<vmem>>, %arg12: memref<1x64x32xbf16, #tpu.memory_space<vmem>>, %arg13: memref<1x1x32xf32, #tpu.memory_space<vmem>>, %arg14: memref<1x8x32xf32, #tpu.memory_space<vmem>>) attributes {dimension_semantics = [#tpu.dimension_semantics<parallel>, #tpu.dimension_semantics<arbitrary>], iteration_bounds = array<i64: 2, 2>, scalar_prefetch = 0 : i64, scratch_operands = 0 : i64, tpu.core_type = #tpu.core_type<tc>, window_params = [{transform_indices = @transform_0, window_bounds = array<i64: 1, 8, 32>}, {transform_indices = @transform_1, window_bounds = array<i64: 1, 1, 32>}, {transform_indices = @transform_2, window_bounds = array<i64: 1, 1, 32>}, {transform_indices = @transform_3, window_bounds = array<i64: 1, 32, 96>}, {transform_indices = @transform_4, window_bounds = array<i64: 1, 32, 32>}, {transform_indices = @transform_5, window_bounds = array<i64: 1, 1, 32>}, {transform_indices = @transform_6, window_bounds = array<i64: 1, 1, 32>}, {transform_indices = @transform_7, window_bounds = array<i64: 1, 1, 32>}, {transform_indices = @transform_8, window_bounds = array<i64: 1, 32, 64>}, {transform_indices = @transform_9, window_bounds = array<i64: 1, 1, 64>}, {transform_indices = @transform_10, window_bounds = array<i64: 1, 64, 32>}, {transform_indices = @transform_11, window_bounds = array<i64: 1, 1, 32>}, {transform_indices = @transform_12, window_bounds = array<i64: 1, 8, 32>}]} {
    %c0_i32 = arith.constant 0 : i32
    %0 = arith.cmpi eq, %arg1, %c0_i32 : i32
    %1 = arith.extui %0 : i1 to i32
    %c0_i32_0 = arith.constant 0 : i32
    %2 = arith.cmpi ne, %1, %c0_i32_0 : i32
    scf.if %2 {
      %c0_61 = arith.constant 0 : index
      %c0_62 = arith.constant 0 : index
      %c0_63 = arith.constant 0 : index
      %157 = vector.load %arg2[%c0_61, %c0_62, %c0_63] : memref<1x8x32xf32, #tpu.memory_space<vmem>>, vector<1x8x32xf32>
      %c0_64 = arith.constant 0 : index
      %c0_65 = arith.constant 0 : index
      %c0_66 = arith.constant 0 : index
      %158 = vector.load %arg14[%c0_64, %c0_65, %c0_66] : memref<1x8x32xf32, #tpu.memory_space<vmem>>, vector<1x8x32xf32>
      tpu.vector_store %arg14[%c0_64, %c0_65, %c0_66], %157 {strides = array<i32>} : memref<1x8x32xf32, #tpu.memory_space<vmem>>, vector<1x8x32xf32>,
    } else {
    }
    %c0 = arith.constant 0 : index
    %c0_1 = arith.constant 0 : index
    %c0_2 = arith.constant 0 : index
    %3 = vector.load %arg14[%c0, %c0_1, %c0_2] : memref<1x8x32xf32, #tpu.memory_space<vmem>>, vector<1x8x32xf32>
    %4 = vector.shape_cast %3 : vector<1x8x32xf32> to vector<8x32xf32>
    %c0_3 = arith.constant 0 : index
    %c0_4 = arith.constant 0 : index
    %c0_5 = arith.constant 0 : index
    %5 = vector.load %arg3[%c0_3, %c0_4, %c0_5] : memref<1x1x32xf32, #tpu.memory_space<vmem>>, vector<1x1x32xf32>
    %6 = vector.shape_cast %5 : vector<1x1x32xf32> to vector<1x32xf32>
    %c0_6 = arith.constant 0 : index
    %c0_7 = arith.constant 0 : index
    %c0_8 = arith.constant 0 : index
    %7 = vector.load %arg4[%c0_6, %c0_7, %c0_8] : memref<1x1x32xf32, #tpu.memory_space<vmem>>, vector<1x1x32xf32>
    %8 = vector.shape_cast %7 : vector<1x1x32xf32> to vector<1x32xf32>
    %cst = arith.constant dense<0.000000e+00> : vector<8xf32>
    %9 = vector.multi_reduction <add>, %4, %cst [1] : vector<8x32xf32> to vector<8xf32>
    %10 = vector.shape_cast %9 : vector<8xf32> to vector<8x1xf32>
    %cst_9 = arith.constant 3.200000e+01 : f32
    %11 = vector.broadcast %cst_9 : f32 to vector<8x1xf32>
    %12 = arith.divf %10, %11 : vector<8x1xf32>
    %13 = vector.broadcast %12 : vector<8x1xf32> to vector<8x32xf32>
    %14 = arith.subf %4, %13 : vector<8x32xf32>
    %15 = arith.mulf %14, %14 : vector<8x32xf32>
    %cst_10 = arith.constant dense<0.000000e+00> : vector<8xf32>
    %16 = vector.multi_reduction <add>, %15, %cst_10 [1] : vector<8x32xf32> to vector<8xf32>
    %17 = vector.shape_cast %16 : vector<8xf32> to vector<8x1xf32>
    %cst_11 = arith.constant 3.200000e+01 : f32
    %18 = vector.broadcast %cst_11 : f32 to vector<8x1xf32>
    %19 = arith.divf %17, %18 : vector<8x1xf32>
    %20 = vector.broadcast %12 : vector<8x1xf32> to vector<8x32xf32>
    %21 = arith.subf %4, %20 : vector<8x32xf32>
    %cst_12 = arith.constant 9.99999974E-6 : f32
    %22 = vector.broadcast %cst_12 : f32 to vector<8x1xf32>
    %23 = arith.addf %19, %22 : vector<8x1xf32>
    %24 = math.rsqrt %23 : vector<8x1xf32>
    %25 = vector.broadcast %24 : vector<8x1xf32> to vector<8x32xf32>
    %26 = arith.mulf %21, %25 : vector<8x32xf32>
    %27 = vector.broadcast %6 : vector<1x32xf32> to vector<8x32xf32>
    %28 = arith.mulf %26, %27 : vector<8x32xf32>
    %29 = vector.broadcast %8 : vector<1x32xf32> to vector<8x32xf32>
    %30 = arith.addf %28, %29 : vector<8x32xf32>
    %31 = arith.truncf %30 : vector<8x32xf32> to vector<8x32xbf16>
    %c0_13 = arith.constant 0 : index
    %c0_14 = arith.constant 0 : index
    %c0_15 = arith.constant 0 : index
    %32 = vector.load %arg5[%c0_13, %c0_14, %c0_15] : memref<1x32x96xbf16, #tpu.memory_space<vmem>>, vector<1x32x96xbf16>
    %33 = vector.shape_cast %32 : vector<1x32x96xbf16> to vector<32x96xbf16>
    %cst_16 = arith.constant dense<0.000000e+00> : vector<8x96xf32>
    %34 = tpu.matmul %31, %33, %cst_16 {dimension_numbers = #tpu.dot_dimension_numbers<[1], [0], [0], [1], [0, 0, 1, 1], [], []>} : vector<8x32xbf16>, vector<32x96xbf16>, vector<8x96xf32> -> vector<8x96xf32>
    %35 = vector.extract_strided_slice %34 {offsets = [0, 0], sizes = [8, 32], strides = [1, 1]} : vector<8x96xf32> to vector<8x32xf32>
    %cst_17 = arith.constant 0.353553385 : f32
    %36 = vector.broadcast %cst_17 : f32 to vector<8x32xf32>
    %37 = arith.mulf %35, %36 : vector<8x32xf32>
    %38 = vector.extract_strided_slice %34 {offsets = [0, 32], sizes = [8, 32], strides = [1, 1]} : vector<8x96xf32> to vector<8x32xf32>
    %39 = vector.extract_strided_slice %34 {offsets = [0, 64], sizes = [8, 32], strides = [1, 1]} : vector<8x96xf32> to vector<8x32xf32>
    %40 = vector.extract_strided_slice %37 {offsets = [0, 0], sizes = [8, 8], strides = [1, 1]} : vector<8x32xf32> to vector<8x8xf32>
    %41 = vector.extract_strided_slice %37 {offsets = [0, 8], sizes = [8, 8], strides = [1, 1]} : vector<8x32xf32> to vector<8x8xf32>
    %42 = vector.extract_strided_slice %37 {offsets = [0, 16], sizes = [8, 8], strides = [1, 1]} : vector<8x32xf32> to vector<8x8xf32>
    %43 = vector.extract_strided_slice %37 {offsets = [0, 24], sizes = [8, 8], strides = [1, 1]} : vector<8x32xf32> to vector<8x8xf32>
    %44 = vector.shape_cast %40 : vector<8x8xf32> to vector<1x8x8xf32>
    %45 = vector.shape_cast %41 : vector<8x8xf32> to vector<1x8x8xf32>
    %46 = vector.shape_cast %42 : vector<8x8xf32> to vector<1x8x8xf32>
    %47 = vector.shape_cast %43 : vector<8x8xf32> to vector<1x8x8xf32>
    %48 = tpu.concatenate %44, %45, %46, %47 in 0 : vector<1x8x8xf32>, vector<1x8x8xf32>, vector<1x8x8xf32>, vector<1x8x8xf32> -> vector<4x8x8xf32>
    %49 = vector.extract_strided_slice %38 {offsets = [0, 0], sizes = [8, 8], strides = [1, 1]} : vector<8x32xf32> to vector<8x8xf32>
    %50 = vector.extract_strided_slice %38 {offsets = [0, 8], sizes = [8, 8], strides = [1, 1]} : vector<8x32xf32> to vector<8x8xf32>
    %51 = vector.extract_strided_slice %38 {offsets = [0, 16], sizes = [8, 8], strides = [1, 1]} : vector<8x32xf32> to vector<8x8xf32>
    %52 = vector.extract_strided_slice %38 {offsets = [0, 24], sizes = [8, 8], strides = [1, 1]} : vector<8x32xf32> to vector<8x8xf32>
    %53 = vector.shape_cast %49 : vector<8x8xf32> to vector<1x8x8xf32>
    %54 = vector.shape_cast %50 : vector<8x8xf32> to vector<1x8x8xf32>
    %55 = vector.shape_cast %51 : vector<8x8xf32> to vector<1x8x8xf32>
    %56 = vector.shape_cast %52 : vector<8x8xf32> to vector<1x8x8xf32>
    %57 = tpu.concatenate %53, %54, %55, %56 in 0 : vector<1x8x8xf32>, vector<1x8x8xf32>, vector<1x8x8xf32>, vector<1x8x8xf32> -> vector<4x8x8xf32>
    %58 = vector.extract_strided_slice %39 {offsets = [0, 0], sizes = [8, 8], strides = [1, 1]} : vector<8x32xf32> to vector<8x8xf32>
    %59 = vector.extract_strided_slice %39 {offsets = [0, 8], sizes = [8, 8], strides = [1, 1]} : vector<8x32xf32> to vector<8x8xf32>
    %60 = vector.extract_strided_slice %39 {offsets = [0, 16], sizes = [8, 8], strides = [1, 1]} : vector<8x32xf32> to vector<8x8xf32>
    %61 = vector.extract_strided_slice %39 {offsets = [0, 24], sizes = [8, 8], strides = [1, 1]} : vector<8x32xf32> to vector<8x8xf32>
    %62 = vector.shape_cast %58 : vector<8x8xf32> to vector<1x8x8xf32>
    %63 = vector.shape_cast %59 : vector<8x8xf32> to vector<1x8x8xf32>
    %64 = vector.shape_cast %60 : vector<8x8xf32> to vector<1x8x8xf32>
    %65 = vector.shape_cast %61 : vector<8x8xf32> to vector<1x8x8xf32>
    %66 = tpu.concatenate %62, %63, %64, %65 in 0 : vector<1x8x8xf32>, vector<1x8x8xf32>, vector<1x8x8xf32>, vector<1x8x8xf32> -> vector<4x8x8xf32>
    %67 = arith.truncf %48 : vector<4x8x8xf32> to vector<4x8x8xbf16>
    %68 = arith.truncf %57 : vector<4x8x8xf32> to vector<4x8x8xbf16>
    "tpu.trace_start"() <{level = 10 : i32, message = "hnd,hmd->hnm"}> : () -> ()
    %cst_18 = arith.constant dense<0.000000e+00> : vector<4x8x8xf32>
    %69 = tpu.matmul %67, %68, %cst_18 {dimension_numbers = #tpu.dot_dimension_numbers<[2], [2], [1], [1], [0, 0, 0, 1, 1, 1], [0], [0]>} : vector<4x8x8xbf16>, vector<4x8x8xbf16>, vector<4x8x8xf32> -> vector<4x8x8xf32>
    "tpu.trace_stop"() : () -> ()
    %cst_19 = arith.constant dense<0xFF800000> : vector<4x8xf32>
    %70 = vector.multi_reduction <maximumf>, %69, %cst_19 [2] : vector<4x8x8xf32> to vector<4x8xf32>
    %71 = vector.shape_cast %70 : vector<4x8xf32> to vector<4x8x1xf32>
    %72 = vector.broadcast %71 : vector<4x8x1xf32> to vector<4x8x8xf32>
    %73 = arith.subf %69, %72 : vector<4x8x8xf32>
    %74 = math.exp %73 : vector<4x8x8xf32>
    %cst_20 = arith.constant dense<0.000000e+00> : vector<4x8xf32>
    %75 = vector.multi_reduction <add>, %74, %cst_20 [2] : vector<4x8x8xf32> to vector<4x8xf32>
    %76 = vector.shape_cast %75 : vector<4x8xf32> to vector<4x8x1xf32>
    %77 = tpu.reciprocal %76 {approx = true} : vector<4x8x1xf32> -> vector<4x8x1xf32>
    %78 = vector.broadcast %77 : vector<4x8x1xf32> to vector<4x8x8xf32>
    %79 = arith.mulf %74, %78 : vector<4x8x8xf32>
    %80 = arith.truncf %79 : vector<4x8x8xf32> to vector<4x8x8xbf16>
    %81 = arith.truncf %66 : vector<4x8x8xf32> to vector<4x8x8xbf16>
    "tpu.trace_start"() <{level = 10 : i32, message = "hnm,hmd->hnd"}> : () -> ()
    %cst_21 = arith.constant dense<0.000000e+00> : vector<4x8x8xf32>
    %82 = tpu.matmul %80, %81, %cst_21 {dimension_numbers = #tpu.dot_dimension_numbers<[2], [1], [1], [2], [0, 0, 0, 1, 1, 2], [0], [0]>} : vector<4x8x8xbf16>, vector<4x8x8xbf16>, vector<4x8x8xf32> -> vector<4x8x8xf32>
    "tpu.trace_stop"() : () -> ()
    %83 = vector.extract_strided_slice %82 {offsets = [0, 0, 0], sizes = [1, 8, 8], strides = [1, 1, 1]} : vector<4x8x8xf32> to vector<1x8x8xf32>
    %84 = vector.shape_cast %83 : vector<1x8x8xf32> to vector<8x8xf32>
    %85 = vector.extract_strided_slice %82 {offsets = [1, 0, 0], sizes = [1, 8, 8], strides = [1, 1, 1]} : vector<4x8x8xf32> to vector<1x8x8xf32>
    %86 = vector.shape_cast %85 : vector<1x8x8xf32> to vector<8x8xf32>
    %87 = vector.extract_strided_slice %82 {offsets = [2, 0, 0], sizes = [1, 8, 8], strides = [1, 1, 1]} : vector<4x8x8xf32> to vector<1x8x8xf32>
    %88 = vector.shape_cast %87 : vector<1x8x8xf32> to vector<8x8xf32>
    %89 = vector.extract_strided_slice %82 {offsets = [3, 0, 0], sizes = [1, 8, 8], strides = [1, 1, 1]} : vector<4x8x8xf32> to vector<1x8x8xf32>
    %90 = vector.shape_cast %89 : vector<1x8x8xf32> to vector<8x8xf32>
    %91 = tpu.concatenate %84, %86, %88, %90 in 1 : vector<8x8xf32>, vector<8x8xf32>, vector<8x8xf32>, vector<8x8xf32> -> vector<8x32xf32>
    %92 = arith.truncf %91 : vector<8x32xf32> to vector<8x32xbf16>
    %c0_22 = arith.constant 0 : index
    %c0_23 = arith.constant 0 : index
    %c0_24 = arith.constant 0 : index
    %93 = vector.load %arg6[%c0_22, %c0_23, %c0_24] : memref<1x32x32xbf16, #tpu.memory_space<vmem>>, vector<1x32x32xbf16>
    %94 = vector.shape_cast %93 : vector<1x32x32xbf16> to vector<32x32xbf16>
    %cst_25 = arith.constant dense<0.000000e+00> : vector<8x32xf32>
    %95 = tpu.matmul %92, %94, %cst_25 {dimension_numbers = #tpu.dot_dimension_numbers<[1], [0], [0], [1], [0, 0, 1, 1], [], []>} : vector<8x32xbf16>, vector<32x32xbf16>, vector<8x32xf32> -> vector<8x32xf32>
    %c0_26 = arith.constant 0 : index
    %c0_27 = arith.constant 0 : index
    %c0_28 = arith.constant 0 : index
    %96 = vector.load %arg7[%c0_26, %c0_27, %c0_28] : memref<1x1x32xf32, #tpu.memory_space<vmem>>, vector<1x1x32xf32>
    %97 = vector.shape_cast %96 : vector<1x1x32xf32> to vector<1x32xf32>
    %98 = vector.broadcast %97 : vector<1x32xf32> to vector<8x32xf32>
    %99 = arith.addf %95, %98 : vector<8x32xf32>
    %100 = arith.addf %99, %4 : vector<8x32xf32>
    %c0_29 = arith.constant 0 : index
    %c0_30 = arith.constant 0 : index
    %c0_31 = arith.constant 0 : index
    %101 = vector.load %arg8[%c0_29, %c0_30, %c0_31] : memref<1x1x32xf32, #tpu.memory_space<vmem>>, vector<1x1x32xf32>
    %102 = vector.shape_cast %101 : vector<1x1x32xf32> to vector<1x32xf32>
    %c0_32 = arith.constant 0 : index
    %c0_33 = arith.constant 0 : index
    %c0_34 = arith.constant 0 : index
    %103 = vector.load %arg9[%c0_32, %c0_33, %c0_34] : memref<1x1x32xf32, #tpu.memory_space<vmem>>, vector<1x1x32xf32>
    %104 = vector.shape_cast %103 : vector<1x1x32xf32> to vector<1x32xf32>
    %cst_35 = arith.constant dense<0.000000e+00> : vector<8xf32>
    %105 = vector.multi_reduction <add>, %100, %cst_35 [1] : vector<8x32xf32> to vector<8xf32>
    %106 = vector.shape_cast %105 : vector<8xf32> to vector<8x1xf32>
    %cst_36 = arith.constant 3.200000e+01 : f32
    %107 = vector.broadcast %cst_36 : f32 to vector<8x1xf32>
    %108 = arith.divf %106, %107 : vector<8x1xf32>
    %109 = vector.broadcast %108 : vector<8x1xf32> to vector<8x32xf32>
    %110 = arith.subf %100, %109 : vector<8x32xf32>
    %111 = arith.mulf %110, %110 : vector<8x32xf32>
    %cst_37 = arith.constant dense<0.000000e+00> : vector<8xf32>
    %112 = vector.multi_reduction <add>, %111, %cst_37 [1] : vector<8x32xf32> to vector<8xf32>
    %113 = vector.shape_cast %112 : vector<8xf32> to vector<8x1xf32>
    %cst_38 = arith.constant 3.200000e+01 : f32
    %114 = vector.broadcast %cst_38 : f32 to vector<8x1xf32>
    %115 = arith.divf %113, %114 : vector<8x1xf32>
    %116 = vector.broadcast %108 : vector<8x1xf32> to vector<8x32xf32>
    %117 = arith.subf %100, %116 : vector<8x32xf32>
    %cst_39 = arith.constant 9.99999974E-6 : f32
    %118 = vector.broadcast %cst_39 : f32 to vector<8x1xf32>
    %119 = arith.addf %115, %118 : vector<8x1xf32>
    %120 = math.rsqrt %119 : vector<8x1xf32>
    %121 = vector.broadcast %120 : vector<8x1xf32> to vector<8x32xf32>
    %122 = arith.mulf %117, %121 : vector<8x32xf32>
    %123 = vector.broadcast %102 : vector<1x32xf32> to vector<8x32xf32>
    %124 = arith.mulf %122, %123 : vector<8x32xf32>
    %125 = vector.broadcast %104 : vector<1x32xf32> to vector<8x32xf32>
    %126 = arith.addf %124, %125 : vector<8x32xf32>
    %127 = arith.truncf %126 : vector<8x32xf32> to vector<8x32xbf16>
    %c0_40 = arith.constant 0 : index
    %c0_41 = arith.constant 0 : index
    %c0_42 = arith.constant 0 : index
    %128 = vector.load %arg10[%c0_40, %c0_41, %c0_42] : memref<1x32x64xbf16, #tpu.memory_space<vmem>>, vector<1x32x64xbf16>
    %129 = vector.shape_cast %128 : vector<1x32x64xbf16> to vector<32x64xbf16>
    %cst_43 = arith.constant dense<0.000000e+00> : vector<8x64xf32>
    %130 = tpu.matmul %127, %129, %cst_43 {dimension_numbers = #tpu.dot_dimension_numbers<[1], [0], [0], [1], [0, 0, 1, 1], [], []>} : vector<8x32xbf16>, vector<32x64xbf16>, vector<8x64xf32> -> vector<8x64xf32>
    %c0_44 = arith.constant 0 : index
    %c0_45 = arith.constant 0 : index
    %c0_46 = arith.constant 0 : index
    %131 = vector.load %arg11[%c0_44, %c0_45, %c0_46] : memref<1x1x64xf32, #tpu.memory_space<vmem>>, vector<1x1x64xf32>
    %132 = vector.shape_cast %131 : vector<1x1x64xf32> to vector<1x64xf32>
    %133 = vector.broadcast %132 : vector<1x64xf32> to vector<8x64xf32>
    %134 = arith.addf %130, %133 : vector<8x64xf32>
    %cst_47 = arith.constant 5.000000e-01 : f32
    %135 = vector.broadcast %cst_47 : f32 to vector<8x64xf32>
    %136 = arith.mulf %135, %134 : vector<8x64xf32>
    %cst_48 = arith.constant 2.000000e+00 : f32
    %137 = math.sqrt %cst_48 : f32
    %cst_49 = arith.constant 1.000000e+00 : f32
    %138 = arith.divf %cst_49, %137 : f32
    %139 = vector.broadcast %138 : f32 to vector<8x64xf32>
    %140 = arith.mulf %134, %139 : vector<8x64xf32>
    %141 = math.erf %140 : vector<8x64xf32>
    %cst_50 = arith.constant 1.000000e+00 : f32
    %142 = vector.broadcast %cst_50 : f32 to vector<8x64xf32>
    %143 = arith.addf %142, %141 : vector<8x64xf32>
    %144 = arith.mulf %136, %143 : vector<8x64xf32>
    %145 = arith.truncf %144 : vector<8x64xf32> to vector<8x64xbf16>
    %c0_51 = arith.constant 0 : index
    %c0_52 = arith.constant 0 : index
    %c0_53 = arith.constant 0 : index
    %146 = vector.load %arg12[%c0_51, %c0_52, %c0_53] : memref<1x64x32xbf16, #tpu.memory_space<vmem>>, vector<1x64x32xbf16>
    %147 = vector.shape_cast %146 : vector<1x64x32xbf16> to vector<64x32xbf16>
    %cst_54 = arith.constant dense<0.000000e+00> : vector<8x32xf32>
    %148 = tpu.matmul %145, %147, %cst_54 {dimension_numbers = #tpu.dot_dimension_numbers<[1], [0], [0], [1], [0, 0, 1, 1], [], []>} : vector<8x64xbf16>, vector<64x32xbf16>, vector<8x32xf32> -> vector<8x32xf32>
    %c0_55 = arith.constant 0 : index
    %c0_56 = arith.constant 0 : index
    %c0_57 = arith.constant 0 : index
    %149 = vector.load %arg13[%c0_55, %c0_56, %c0_57] : memref<1x1x32xf32, #tpu.memory_space<vmem>>, vector<1x1x32xf32>
    %150 = vector.shape_cast %149 : vector<1x1x32xf32> to vector<1x32xf32>
    %151 = vector.broadcast %150 : vector<1x32xf32> to vector<8x32xf32>
    %152 = arith.addf %148, %151 : vector<8x32xf32>
    %153 = arith.addf %152, %100 : vector<8x32xf32>
    %c0_58 = arith.constant 0 : index
    %c0_59 = arith.constant 0 : index
    %c0_60 = arith.constant 0 : index
    %154 = vector.load %arg14[%c0_58, %c0_59, %c0_60] : memref<1x8x32xf32, #tpu.memory_space<vmem>>, vector<1x8x32xf32>
    %155 = vector.shape_cast %154 : vector<1x8x32xf32> to vector<8x32xf32>
    %156 = vector.shape_cast %153 : vector<8x32xf32> to vector<1x8x32xf32>
    tpu.vector_store %arg14[%c0_58, %c0_59, %c0_60], %156 {strides = array<i32>} : memref<1x8x32xf32, #tpu.memory_space<vmem>>, vector<1x8x32xf32>,
    return
  }
  func.func @transform_0(%arg0: i32, %arg1: i32) -> (i32, i32, i32) {
    %c0_i32 = arith.constant 0 : i32
    %c0_i32_0 = arith.constant 0 : i32
    %c0_i32_1 = arith.constant 0 : i32
    return %arg0, %c0_i32, %c0_i32_0 : i32, i32, i32
  }
  func.func @transform_1(%arg0: i32, %arg1: i32) -> (i32, i32, i32) {
    %c0_i32 = arith.constant 0 : i32
    %c0_i32_0 = arith.constant 0 : i32
    %c0_i32_1 = arith.constant 0 : i32
    return %arg1, %c0_i32, %c0_i32_0 : i32, i32, i32
  }
  func.func @transform_2(%arg0: i32, %arg1: i32) -> (i32, i32, i32) {
    %c0_i32 = arith.constant 0 : i32
    %c0_i32_0 = arith.constant 0 : i32
    %c0_i32_1 = arith.constant 0 : i32
    return %arg1, %c0_i32, %c0_i32_0 : i32, i32, i32
  }
  func.func @transform_3(%arg0: i32, %arg1: i32) -> (i32, i32, i32) {
    %c0_i32 = arith.constant 0 : i32
    %c0_i32_0 = arith.constant 0 : i32
    %c0_i32_1 = arith.constant 0 : i32
    return %arg1, %c0_i32, %c0_i32_0 : i32, i32, i32
  }
  func.func @transform_4(%arg0: i32, %arg1: i32) -> (i32, i32, i32) {
    %c0_i32 = arith.constant 0 : i32
    %c0_i32_0 = arith.constant 0 : i32
    %c0_i32_1 = arith.constant 0 : i32
    return %arg1, %c0_i32, %c0_i32_0 : i32, i32, i32
  }
  func.func @transform_5(%arg0: i32, %arg1: i32) -> (i32, i32, i32) {
    %c0_i32 = arith.constant 0 : i32
    %c0_i32_0 = arith.constant 0 : i32
    %c0_i32_1 = arith.constant 0 : i32
    return %arg1, %c0_i32, %c0_i32_0 : i32, i32, i32
  }
  func.func @transform_6(%arg0: i32, %arg1: i32) -> (i32, i32, i32) {
    %c0_i32 = arith.constant 0 : i32
    %c0_i32_0 = arith.constant 0 : i32
    %c0_i32_1 = arith.constant 0 : i32
    return %arg1, %c0_i32, %c0_i32_0 : i32, i32, i32
  }
  func.func @transform_7(%arg0: i32, %arg1: i32) -> (i32, i32, i32) {
    %c0_i32 = arith.constant 0 : i32
    %c0_i32_0 = arith.constant 0 : i32
    %c0_i32_1 = arith.constant 0 : i32
    return %arg1, %c0_i32, %c0_i32_0 : i32, i32, i32
  }
  func.func @transform_8(%arg0: i32, %arg1: i32) -> (i32, i32, i32) {
    %c0_i32 = arith.constant 0 : i32
    %c0_i32_0 = arith.constant 0 : i32
    %c0_i32_1 = arith.constant 0 : i32
    return %arg1, %c0_i32, %c0_i32_0 : i32, i32, i32
  }
  func.func @transform_9(%arg0: i32, %arg1: i32) -> (i32, i32, i32) {
    %c0_i32 = arith.constant 0 : i32
    %c0_i32_0 = arith.constant 0 : i32
    %c0_i32_1 = arith.constant 0 : i32
    return %arg1, %c0_i32, %c0_i32_0 : i32, i32, i32
  }
  func.func @transform_10(%arg0: i32, %arg1: i32) -> (i32, i32, i32) {
    %c0_i32 = arith.constant 0 : i32
    %c0_i32_0 = arith.constant 0 : i32
    %c0_i32_1 = arith.constant 0 : i32
    return %arg1, %c0_i32, %c0_i32_0 : i32, i32, i32
  }
  func.func @transform_11(%arg0: i32, %arg1: i32) -> (i32, i32, i32) {
    %c0_i32 = arith.constant 0 : i32
    %c0_i32_0 = arith.constant 0 : i32
    %c0_i32_1 = arith.constant 0 : i32
    return %arg1, %c0_i32, %c0_i32_0 : i32, i32, i32
  }
  func.func @transform_12(%arg0: i32, %arg1: i32) -> (i32, i32, i32) {
    %c0_i32 = arith.constant 0 : i32
    %c0_i32_0 = arith.constant 0 : i32
    %c0_i32_1 = arith.constant 0 : i32
    return %arg0, %c0_i32, %c0_i32_0 : i32, i32, i32
  }
}

</mosaic_0001>

<llo_original>
// kernel: transformer_forward.1
$region0: #{transformer_forward.1}
  #allocation0 [shape = 'u32[]', space=smem, size = 0x4, offset = 0x4, fixed_abs, tag = 'smem constant byte address 0x4 - core index']
  #allocation1 [shape = 'u32[144,128]{1,0:T(1,128)}', space=vmem, size = 0x12000, scoped, tag = 'internal scratch']
  %s0 = inlined_call_operand.hbm [shape: f32[2,8,32], index: 0, kind: input, shape index: {}]
  %s1 = inlined_call_operand.vmem [shape: f32[2,1,32], index: 1, kind: input, shape index: {}]
  %s2 = inlined_call_operand.hbm [shape: f32[2,1,32], index: 2, kind: input, shape index: {}]
  %s3 = inlined_call_operand.vmem [shape: bf16[2,32,96], index: 3, kind: input, shape index: {}]
  %s4 = inlined_call_operand.vmem [shape: bf16[2,32,32], index: 4, kind: input, shape index: {}]
  %s5 = inlined_call_operand.hbm [shape: f32[2,1,32], index: 5, kind: input, shape index: {}]
  %s6 = inlined_call_operand.hbm [shape: f32[2,1,32], index: 6, kind: input, shape index: {}]
  %s7 = inlined_call_operand.hbm [shape: f32[2,1,32], index: 7, kind: input, shape index: {}]
  %s8 = inlined_call_operand.vmem [shape: bf16[2,32,64], index: 8, kind: input, shape index: {}]
  %s9 = inlined_call_operand.hbm [shape: f32[2,1,64], index: 9, kind: input, shape index: {}]
  %s10 = inlined_call_operand.vmem [shape: bf16[2,64,32], index: 10, kind: input, shape index: {}]
  %s11 = inlined_call_operand.hbm [shape: f32[2,1,32], index: 11, kind: input, shape index: {}]
  %s12 = inlined_call_operand.hbm [shape: f32[2,8,32], index: 12, kind: output, shape index: {}]
  %s13 = sld [smem:[#allocation0]]
  $region113: #{transformer_forward.1} parent=0
    _
  %s15 = ssub.s32 1, %s13
  %s16 = scalar_select 0, %s15, %s13
  $region1: #{transformer_forward.1} parent=0
    #allocation2 [shape = 'u8[8192]{0}', space=vmem, size = 0x2000, scoped, tag = 'input window, operand 0']
    #allocation3 [shape = 's32[2]{0}', space=sflag, size = 0x8, scoped, tag = 'scoped memory for transformer_forward.1']
    #allocation4 [shape = 's32[2]{0}', space=sflag, size = 0x8, scoped, tag = 'scoped memory for transformer_forward.1']
    #allocation5 [shape = 'u8[1024]{0}', space=vmem, size = 0x400, scoped, tag = 'input window, operand 2']
    #allocation6 [shape = 's32[2]{0}', space=sflag, size = 0x8, scoped, tag = 'scoped memory for transformer_forward.1']
    #allocation7 [shape = 'u8[1024]{0}', space=vmem, size = 0x400, scoped, tag = 'input window, operand 5']
    #allocation8 [shape = 'u8[1024]{0}', space=vmem, size = 0x400, scoped, tag = 'input window, operand 6']
    #allocation9 [shape = 's32[2]{0}', space=sflag, size = 0x8, scoped, tag = 'scoped memory for transformer_forward.1']
    #allocation10 [shape = 'u8[1024]{0}', space=vmem, size = 0x400, scoped, tag = 'input window, operand 7']
    #allocation11 [shape = 'u8[1024]{0}', space=vmem, size = 0x400, scoped, tag = 'input window, operand 9']
    #allocation12 [shape = 's32[2]{0}', space=sflag, size = 0x8, scoped, tag = 'scoped memory for transformer_forward.1']
    #allocation13 [shape = 'u8[1024]{0}', space=vmem, size = 0x400, scoped, tag = 'input window, operand 11']
    #allocation14 [shape = 'u8[8192]{0}', space=vmem, size = 0x2000, scoped, tag = 'output window, operand 0']
    %17 = vsyncpa [#allocation3], 0
    %s18 = scalar_lea.sflag [#allocation3], 1
    %19 = vsyncpa %s18, 0
    %20 = vsyncpa [#allocation6], 0
    %s21 = scalar_lea.sflag [#allocation6], 1
    %22 = vsyncpa %s21, 0
    %23 = vsyncpa [#allocation9], 0
    %s24 = scalar_lea.sflag [#allocation9], 1
    %25 = vsyncpa %s24, 0
    %26 = vsyncpa [#allocation12], 0
    %s27 = scalar_lea.sflag [#allocation12], 1
    %28 = vsyncpa %s27, 0
    %29 = vsyncpa [#allocation4], 0
    %s30 = scalar_lea.sflag [#allocation4], 1
    %31 = vsyncpa %s30, 0
    loop: start=0, step=1, limit=6
    $region2: #{transformer_forward.1} parent=1 // loop_pre_header
      _
    $region3: #{transformer_forward.1} parent=1 // loop_header
      %s33 = sphi 0, %s37
      %p34 = scmp.ge.s32.totalorder %s33, 6
      %s40 = sphi 0, %s52
      %s41 = sphi 0, %s48
      %s42 = sphi 0, %s40
      %s43 = sphi 0, %s41
      %s44 = sphi 0, %s42
      %s45 = sphi 0, %s43
      %s55 = sphi 0, %s57
      %s58 = sphi 0, %s55
      %s59 = sphi 0, %s58
      %s75 = sphi 0, %s59
      %s81 = sphi 0, %s83
      %s84 = sphi 0, %s81
      %s85 = sphi 0, %s84
      %s101 = sphi 0, %s85
      %s107 = sphi 0, %s109
      %s110 = sphi 0, %s107
      %s111 = sphi 0, %s110
      %s127 = sphi 0, %s111
      %s133 = sphi 0, %s135
      %s136 = sphi 0, %s133
      %s137 = sphi 0, %s136
      %s153 = sphi 0, %s137
      %s159 = sphi 0, %s161
      %s162 = sphi 0, %s159
      %s163 = sphi 0, %s162
      %s179 = sphi 0, %s163
      %s185 = sphi 0, %s187
      %s188 = sphi 0, %s185
      %s189 = sphi 0, %s188
      %s205 = sphi 0, %s189
      %s211 = sphi 0, %s213
      %s214 = sphi 0, %s211
      %s215 = sphi 0, %s214
      %s231 = sphi 0, %s215
      %s237 = sphi 0, %s239
      %s240 = sphi 0, %s237
      %s241 = sphi 0, %s240
      %s257 = sphi 0, %s241
      %s263 = sphi 0, %s265
      %s266 = sphi 0, %s263
      %s267 = sphi 0, %s266
      %s283 = sphi 0, %s267
      %s289 = sphi 0, %s291
      %s292 = sphi 0, %s289
      %s293 = sphi 0, %s292
      %s309 = sphi 0, %s293
      %s315 = sphi 0, %s317
      %s318 = sphi 0, %s315
      %s319 = sphi 0, %s318
      %s335 = sphi 0, %s319
      %s341 = sphi 0, %s343
      %s344 = sphi 0, %s341
      %s345 = sphi 0, %s344
      %s361 = sphi 0, %s345
      %s367 = sphi 0, %s369
      %s370 = sphi 0, %s367
      %s371 = sphi 0, %s370
      %s387 = sphi 0, %s371
    $region4: #{transformer_forward.1} parent=1 // loop_header_branch
      %36 = sbr.rel (%p34) target = $region8
    $region5: #{transformer_forward.1} parent=1 // loop_body
      %s38 = ssub.s32 %s33, 1
      %s39 = ssub.s32 %s33, 2
      %s46 = sadd.s32 1, %s41
      %p47 = scmp.ge.s32.totalorder %s46, 2
      %s48 = scalar_select %p47, 0, %s46
      %s49 = sadd.s32 1, %s40
      %s50 = scalar_select %p47, %s49, %s40
      %p51 = scmp.ge.s32.totalorder %s50, 2
      %s52 = scalar_select %p51, 0, %s50
      %s53 = ssub.s32 %s40, %s52
      %p54 = scmp.eq.s32.totalorder %s53, 0
      %s56 = sadd.s32 %s55, 1
      %s57 = scalar_select %p54, %s55, %s56
      %p60 = pneg %p54
      %p61 = scmp.eq.s32.totalorder %s33, 3
      %p62 = por %p60, %p61
      %p63 = scmp.ne.s32.totalorder %s55, %s58
      %p64 = scmp.eq.s32.totalorder %s33, 0
      %p65 = por %p63, %p64
      %p66 = scmp.ne.s32.totalorder %s55, %s58
      %p67 = scmp.eq.s32.totalorder %s38, 3
      %p68 = por %p66, %p67
      %p69 = scmp.ne.s32.totalorder %s58, %s59
      %p70 = scmp.eq.s32.totalorder %s38, 0
      %p71 = por %p69, %p70
      %p72 = scmp.ne.s32.totalorder %s58, %s59
      %p73 = scmp.eq.s32.totalorder %s39, 3
      %p74 = por %p72, %p73
      %p76 = scmp.ne.s32.totalorder %s59, %s75
      %p77 = scmp.eq.s32.totalorder %s39, 0
      %p78 = por %p76, %p77
      %s79 = ssub.s32 %s41, %s48
      %p80 = scmp.eq.s32.totalorder %s79, 0
      %s82 = sadd.s32 %s81, 1
      %s83 = scalar_select %p80, %s81, %s82
      %p86 = pneg %p80
      %p87 = scmp.eq.s32.totalorder %s33, 3
      %p88 = por %p86, %p87
      %p89 = scmp.ne.s32.totalorder %s81, %s84
      %p90 = scmp.eq.s32.totalorder %s33, 0
      %p91 = por %p89, %p90
      %p92 = scmp.ne.s32.totalorder %s81, %s84
      %p93 = scmp.eq.s32.totalorder %s38, 3
      %p94 = por %p92, %p93
      %p95 = scmp.ne.s32.totalorder %s84, %s85
      %p96 = scmp.eq.s32.totalorder %s38, 0
      %p97 = por %p95, %p96
      %p98 = scmp.ne.s32.totalorder %s84, %s85
      %p99 = scmp.eq.s32.totalorder %s39, 3
      %p100 = por %p98, %p99
      %p102 = scmp.ne.s32.totalorder %s85, %s101
      %p103 = scmp.eq.s32.totalorder %s39, 0
      %p104 = por %p102, %p103
      %s105 = ssub.s32 %s41, %s48
      %p106 = scmp.eq.s32.totalorder %s105, 0
      %s108 = sadd.s32 %s107, 1
      %s109 = scalar_select %p106, %s107, %s108
      %p112 = pneg %p106
      %p113 = scmp.eq.s32.totalorder %s33, 3
      %p114 = por %p112, %p113
      %p115 = scmp.ne.s32.totalorder %s107, %s110
      %p116 = scmp.eq.s32.totalorder %s33, 0
      %p117 = por %p115, %p116
      %p118 = scmp.ne.s32.totalorder %s107, %s110
      %p119 = scmp.eq.s32.totalorder %s38, 3
      %p120 = por %p118, %p119
      %p121 = scmp.ne.s32.totalorder %s110, %s111
      %p122 = scmp.eq.s32.totalorder %s38, 0
      %p123 = por %p121, %p122
      %p124 = scmp.ne.s32.totalorder %s110, %s111
      %p125 = scmp.eq.s32.totalorder %s39, 3
      %p126 = por %p124, %p125
      %p128 = scmp.ne.s32.totalorder %s111, %s127
      %p129 = scmp.eq.s32.totalorder %s39, 0
      %p130 = por %p128, %p129
      %s131 = ssub.s32 %s41, %s48
      %p132 = scmp.eq.s32.totalorder %s131, 0
      %s134 = sadd.s32 %s133, 1
      %s135 = scalar_select %p132, %s133, %s134
      %p138 = pneg %p132
      %p139 = scmp.eq.s32.totalorder %s33, 3
      %p140 = por %p138, %p139
      %p141 = scmp.ne.s32.totalorder %s133, %s136
      %p142 = scmp.eq.s32.totalorder %s33, 0
      %p143 = por %p141, %p142
      %p144 = scmp.ne.s32.totalorder %s133, %s136
      %p145 = scmp.eq.s32.totalorder %s38, 3
      %p146 = por %p144, %p145
      %p147 = scmp.ne.s32.totalorder %s136, %s137
      %p148 = scmp.eq.s32.totalorder %s38, 0
      %p149 = por %p147, %p148
      %p150 = scmp.ne.s32.totalorder %s136, %s137
      %p151 = scmp.eq.s32.totalorder %s39, 3
      %p152 = por %p150, %p151
      %p154 = scmp.ne.s32.totalorder %s137, %s153
      %p155 = scmp.eq.s32.totalorder %s39, 0
      %p156 = por %p154, %p155
      %s157 = ssub.s32 %s41, %s48
      %p158 = scmp.eq.s32.totalorder %s157, 0
      %s160 = sadd.s32 %s159, 1
      %s161 = scalar_select %p158, %s159, %s160
      %p164 = pneg %p158
      %p165 = scmp.eq.s32.totalorder %s33, 3
      %p166 = por %p164, %p165
      %p167 = scmp.ne.s32.totalorder %s159, %s162
      %p168 = scmp.eq.s32.totalorder %s33, 0
      %p169 = por %p167, %p168
      %p170 = scmp.ne.s32.totalorder %s159, %s162
      %p171 = scmp.eq.s32.totalorder %s38, 3
      %p172 = por %p170, %p171
      %p173 = scmp.ne.s32.totalorder %s162, %s163
      %p174 = scmp.eq.s32.totalorder %s38, 0
      %p175 = por %p173, %p174
      %p176 = scmp.ne.s32.totalorder %s162, %s163
      %p177 = scmp.eq.s32.totalorder %s39, 3
      %p178 = por %p176, %p177
      %p180 = scmp.ne.s32.totalorder %s163, %s179
      %p181 = scmp.eq.s32.totalorder %s39, 0
      %p182 = por %p180, %p181
      %s183 = ssub.s32 %s41, %s48
      %p184 = scmp.eq.s32.totalorder %s183, 0
      %s186 = sadd.s32 %s185, 1
      %s187 = scalar_select %p184, %s185, %s186
      %p190 = pneg %p184
      %p191 = scmp.eq.s32.totalorder %s33, 3
      %p192 = por %p190, %p191
      %p193 = scmp.ne.s32.totalorder %s185, %s188
      %p194 = scmp.eq.s32.totalorder %s33, 0
      %p195 = por %p193, %p194
      %p196 = scmp.ne.s32.totalorder %s185, %s188
      %p197 = scmp.eq.s32.totalorder %s38, 3
      %p198 = por %p196, %p197
      %p199 = scmp.ne.s32.totalorder %s188, %s189
      %p200 = scmp.eq.s32.totalorder %s38, 0
      %p201 = por %p199, %p200
      %p202 = scmp.ne.s32.totalorder %s188, %s189
      %p203 = scmp.eq.s32.totalorder %s39, 3
      %p204 = por %p202, %p203
      %p206 = scmp.ne.s32.totalorder %s189, %s205
      %p207 = scmp.eq.s32.totalorder %s39, 0
      %p208 = por %p206, %p207
      %s209 = ssub.s32 %s41, %s48
      %p210 = scmp.eq.s32.totalorder %s209, 0
      %s212 = sadd.s32 %s211, 1
      %s213 = scalar_select %p210, %s211, %s212
      %p216 = pneg %p210
      %p217 = scmp.eq.s32.totalorder %s33, 3
      %p218 = por %p216, %p217
      %p219 = scmp.ne.s32.totalorder %s211, %s214
      %p220 = scmp.eq.s32.totalorder %s33, 0
      %p221 = por %p219, %p220
      %p222 = scmp.ne.s32.totalorder %s211, %s214
      %p223 = scmp.eq.s32.totalorder %s38, 3
      %p224 = por %p222, %p223
      %p225 = scmp.ne.s32.totalorder %s214, %s215
      %p226 = scmp.eq.s32.totalorder %s38, 0
      %p227 = por %p225, %p226
      %p228 = scmp.ne.s32.totalorder %s214, %s215
      %p229 = scmp.eq.s32.totalorder %s39, 3
      %p230 = por %p228, %p229
      %p232 = scmp.ne.s32.totalorder %s215, %s231
      %p233 = scmp.eq.s32.totalorder %s39, 0
      %p234 = por %p232, %p233
      %s235 = ssub.s32 %s41, %s48
      %p236 = scmp.eq.s32.totalorder %s235, 0
      %s238 = sadd.s32 %s237, 1
      %s239 = scalar_select %p236, %s237, %s238
      %p242 = pneg %p236
      %p243 = scmp.eq.s32.totalorder %s33, 3
      %p244 = por %p242, %p243
      %p245 = scmp.ne.s32.totalorder %s237, %s240
      %p246 = scmp.eq.s32.totalorder %s33, 0
      %p247 = por %p245, %p246
      %p248 = scmp.ne.s32.totalorder %s237, %s240
      %p249 = scmp.eq.s32.totalorder %s38, 3
      %p250 = por %p248, %p249
      %p251 = scmp.ne.s32.totalorder %s240, %s241
      %p252 = scmp.eq.s32.totalorder %s38, 0
      %p253 = por %p251, %p252
      %p254 = scmp.ne.s32.totalorder %s240, %s241
      %p255 = scmp.eq.s32.totalorder %s39, 3
      %p256 = por %p254, %p255
      %p258 = scmp.ne.s32.totalorder %s241, %s257
      %p259 = scmp.eq.s32.totalorder %s39, 0
      %p260 = por %p258, %p259
      %s261 = ssub.s32 %s41, %s48
      %p262 = scmp.eq.s32.totalorder %s261, 0
      %s264 = sadd.s32 %s263, 1
      %s265 = scalar_select %p262, %s263, %s264
      %p268 = pneg %p262
      %p269 = scmp.eq.s32.totalorder %s33, 3
      %p270 = por %p268, %p269
      %p271 = scmp.ne.s32.totalorder %s263, %s266
      %p272 = scmp.eq.s32.totalorder %s33, 0
      %p273 = por %p271, %p272
      %p274 = scmp.ne.s32.totalorder %s263, %s266
      %p275 = scmp.eq.s32.totalorder %s38, 3
      %p276 = por %p274, %p275
      %p277 = scmp.ne.s32.totalorder %s266, %s267
      %p278 = scmp.eq.s32.totalorder %s38, 0
      %p279 = por %p277, %p278
      %p280 = scmp.ne.s32.totalorder %s266, %s267
      %p281 = scmp.eq.s32.totalorder %s39, 3
      %p282 = por %p280, %p281
      %p284 = scmp.ne.s32.totalorder %s267, %s283
      %p285 = scmp.eq.s32.totalorder %s39, 0
      %p286 = por %p284, %p285
      %s287 = ssub.s32 %s41, %s48
      %p288 = scmp.eq.s32.totalorder %s287, 0
      %s290 = sadd.s32 %s289, 1
      %s291 = scalar_select %p288, %s289, %s290
      %p294 = pneg %p288
      %p295 = scmp.eq.s32.totalorder %s33, 3
      %p296 = por %p294, %p295
      %p297 = scmp.ne.s32.totalorder %s289, %s292
      %p298 = scmp.eq.s32.totalorder %s33, 0
      %p299 = por %p297, %p298
      %p300 = scmp.ne.s32.totalorder %s289, %s292
      %p301 = scmp.eq.s32.totalorder %s38, 3
      %p302 = por %p300, %p301
      %p303 = scmp.ne.s32.totalorder %s292, %s293
      %p304 = scmp.eq.s32.totalorder %s38, 0
      %p305 = por %p303, %p304
      %p306 = scmp.ne.s32.totalorder %s292, %s293
      %p307 = scmp.eq.s32.totalorder %s39, 3
      %p308 = por %p306, %p307
      %p310 = scmp.ne.s32.totalorder %s293, %s309
      %p311 = scmp.eq.s32.totalorder %s39, 0
      %p312 = por %p310, %p311
      %s313 = ssub.s32 %s41, %s48
      %p314 = scmp.eq.s32.totalorder %s313, 0
      %s316 = sadd.s32 %s315, 1
      %s317 = scalar_select %p314, %s315, %s316
      %p320 = pneg %p314
      %p321 = scmp.eq.s32.totalorder %s33, 3
      %p322 = por %p320, %p321
      %p323 = scmp.ne.s32.totalorder %s315, %s318
      %p324 = scmp.eq.s32.totalorder %s33, 0
      %p325 = por %p323, %p324
      %p326 = scmp.ne.s32.totalorder %s315, %s318
      %p327 = scmp.eq.s32.totalorder %s38, 3
      %p328 = por %p326, %p327
      %p329 = scmp.ne.s32.totalorder %s318, %s319
      %p330 = scmp.eq.s32.totalorder %s38, 0
      %p331 = por %p329, %p330
      %p332 = scmp.ne.s32.totalorder %s318, %s319
      %p333 = scmp.eq.s32.totalorder %s39, 3
      %p334 = por %p332, %p333
      %p336 = scmp.ne.s32.totalorder %s319, %s335
      %p337 = scmp.eq.s32.totalorder %s39, 0
      %p338 = por %p336, %p337
      %s339 = ssub.s32 %s41, %s48
      %p340 = scmp.eq.s32.totalorder %s339, 0
      %s342 = sadd.s32 %s341, 1
      %s343 = scalar_select %p340, %s341, %s342
      %p346 = pneg %p340
      %p347 = scmp.eq.s32.totalorder %s33, 3
      %p348 = por %p346, %p347
      %p349 = scmp.ne.s32.totalorder %s341, %s344
      %p350 = scmp.eq.s32.totalorder %s33, 0
      %p351 = por %p349, %p350
      %p352 = scmp.ne.s32.totalorder %s341, %s344
      %p353 = scmp.eq.s32.totalorder %s38, 3
      %p354 = por %p352, %p353
      %p355 = scmp.ne.s32.totalorder %s344, %s345
      %p356 = scmp.eq.s32.totalorder %s38, 0
      %p357 = por %p355, %p356
      %p358 = scmp.ne.s32.totalorder %s344, %s345
      %p359 = scmp.eq.s32.totalorder %s39, 3
      %p360 = por %p358, %p359
      %p362 = scmp.ne.s32.totalorder %s345, %s361
      %p363 = scmp.eq.s32.totalorder %s39, 0
      %p364 = por %p362, %p363
      %s365 = ssub.s32 %s40, %s52
      %p366 = scmp.eq.s32.totalorder %s365, 0
      %s368 = sadd.s32 %s367, 1
      %s369 = scalar_select %p366, %s367, %s368
      %p372 = pneg %p366
      %p373 = scmp.eq.s32.totalorder %s33, 3
      %p374 = por %p372, %p373
      %p375 = scmp.ne.s32.totalorder %s367, %s370
      %p376 = scmp.eq.s32.totalorder %s33, 0
      %p377 = por %p375, %p376
      %p378 = scmp.ne.s32.totalorder %s367, %s370
      %p379 = scmp.eq.s32.totalorder %s38, 3
      %p380 = por %p378, %p379
      %p381 = scmp.ne.s32.totalorder %s370, %s371
      %p382 = scmp.eq.s32.totalorder %s38, 0
      %p383 = por %p381, %p382
      %p384 = scmp.ne.s32.totalorder %s370, %s371
      %p385 = scmp.eq.s32.totalorder %s39, 3
      %p386 = por %p384, %p385
      %p388 = scmp.ne.s32.totalorder %s371, %s387
      %p389 = scmp.eq.s32.totalorder %s39, 0
      %p390 = por %p388, %p389
      %p391 = scmp.le.s32.totalorder 1, %s33
      %p392 = scmp.lt.s32.totalorder %s33, 5
      %p393 = pnand %p391, %p392
      %p394 = pneg %p393
      // Predicated region
      $region9: #{transformer_forward.1} parent=5 // pred_check
        _
      $region10: #{transformer_forward.1} parent=5 // pred_check_branch
        %396 = sbr.rel (%p393) target = $region12
      $region11: #{transformer_forward.1} parent=5 // pred_region
        %s397 = ssub.s32 %s33, 1
      $region12: #{transformer_forward.1} parent=5 // pred_fallthru
        _
      %p398 = scmp.lt.s32.totalorder %s33, 4
      // Predicated region
      $region13: #{transformer_forward.1} parent=5 // pred_check
        %p399 = pneg %p398
      $region14: #{transformer_forward.1} parent=5 // pred_check_branch
        %401 = sbr.rel (%p399) target = $region16
      $region15: #{transformer_forward.1} parent=5 // pred_region
        // Predicated region
        $region17: #{transformer_forward.1} parent=15 // pred_check
          %p402 = pneg %p65
        $region18: #{transformer_forward.1} parent=15 // pred_check_branch
          %404 = sbr.rel (%p402) target = $region20
        $region19: #{transformer_forward.1} parent=15 // pred_region
          %s405 = sand.u32 %s55, 1
          %s406 = scalar_lea.sflag [#allocation3], %s405
          %s407 = sand.u32 %s55, 1
          %s408 = smul.addr %s407, 8
          %s409 = scalar_lea.vmem [#allocation2], %s408
          %s411 = ssub.s32 128, 128
          %412 = vsyncadd %s406, %s411
          %s413 = smul.addr %s40, 128
          %s414 = scalar_lea.hbm %s0, %s413
          %s416 = sshll.u32 %s409, 4
          %s417 = int_to_ptr.vmem [resolvable:$true] %s416
          %419 = dma.hbm_to_vmem [thread:$0]  %s414, 128, %s417, %s406
        $region20: #{transformer_forward.1} parent=15 // pred_fallthru
          _
        // Predicated region
        $region21: #{transformer_forward.1} parent=15 // pred_check
          %p420 = pneg %p91
        $region22: #{transformer_forward.1} parent=15 // pred_check_branch
          %422 = sbr.rel (%p420) target = $region24
        $region23: #{transformer_forward.1} parent=15 // pred_region
          %p423 = scmp.lt.s32.totalorder %s41, 1
          %s424 = scalar_select %p423, %s41, 1
          %s425 = scalar_lea.vmem %s1, %s424
        $region24: #{transformer_forward.1} parent=15 // pred_fallthru
          _
        // Predicated region
        $region25: #{transformer_forward.1} parent=15 // pred_check
          %p426 = pneg %p117
        $region26: #{transformer_forward.1} parent=15 // pred_check_branch
          %428 = sbr.rel (%p426) target = $region28
        $region27: #{transformer_forward.1} parent=15 // pred_region
          %s429 = sand.u32 %s33, 1
          %s430 = scalar_lea.sflag [#allocation6], %s429
          %s431 = sand.u32 %s107, 1
          %s432 = scalar_lea.vmem [#allocation5], %s431
          %s434 = ssub.s32 16, 16
          %435 = vsyncadd %s430, %s434
          %s436 = smul.addr %s41, 16
          %s437 = scalar_lea.hbm %s2, %s436
          %s439 = sshll.u32 %s432, 4
          %s440 = int_to_ptr.vmem [resolvable:$true] %s439
          %442 = dma.hbm_to_vmem [thread:$0]  %s437, 16, %s440, %s430
        $region28: #{transformer_forward.1} parent=15 // pred_fallthru
          _
        // Predicated region
        $region29: #{transformer_forward.1} parent=15 // pred_check
          %p443 = pneg %p143
        $region30: #{transformer_forward.1} parent=15 // pred_check_branch
          %445 = sbr.rel (%p443) target = $region32
        $region31: #{transformer_forward.1} parent=15 // pred_region
          %p446 = scmp.lt.s32.totalorder %s41, 1
          %s447 = scalar_select %p446, %s41, 1
          %s448 = smul.addr %s447, 4
          %s449 = smul.addr %s448, 4
          %s450 = scalar_lea.vmem %s3, %s449
        $region32: #{transformer_forward.1} parent=15 // pred_fallthru
          _
        // Predicated region
        $region33: #{transformer_forward.1} parent=15 // pred_check
          %p451 = pneg %p169
        $region34: #{transformer_forward.1} parent=15 // pred_check_branch
          %453 = sbr.rel (%p451) target = $region36
        $region35: #{transformer_forward.1} parent=15 // pred_region
          %p454 = scmp.lt.s32.totalorder %s41, 1
          %s455 = scalar_select %p454, %s41, 1
          %s456 = smul.addr %s455, 4
          %s457 = smul.addr %s456, 4
          %s458 = scalar_lea.vmem %s4, %s457
        $region36: #{transformer_forward.1} parent=15 // pred_fallthru
          _
        // Predicated region
        $region37: #{transformer_forward.1} parent=15 // pred_check
          %p459 = pneg %p195
        $region38: #{transformer_forward.1} parent=15 // pred_check_branch
          %461 = sbr.rel (%p459) target = $region40
        $region39: #{transformer_forward.1} parent=15 // pred_region
          %s462 = sand.u32 %s33, 1
          %s463 = scalar_lea.sflag [#allocation6], %s462
          %s464 = sand.u32 %s185, 1
          %s465 = scalar_lea.vmem [#allocation7], %s464
          %s467 = ssub.s32 16, 16
          %468 = vsyncadd %s463, %s467
          %s469 = smul.addr %s41, 16
          %s470 = scalar_lea.hbm %s5, %s469
          %s472 = sshll.u32 %s465, 4
          %s473 = int_to_ptr.vmem [resolvable:$true] %s472
          %475 = dma.hbm_to_vmem [thread:$0]  %s470, 16, %s473, %s463
        $region40: #{transformer_forward.1} parent=15 // pred_fallthru
          _
        // Predicated region
        $region41: #{transformer_forward.1} parent=15 // pred_check
          %p476 = pneg %p221
        $region42: #{transformer_forward.1} parent=15 // pred_check_branch
          %478 = sbr.rel (%p476) target = $region44
        $region43: #{transformer_forward.1} parent=15 // pred_region
          %s479 = sand.u32 %s33, 1
          %s480 = scalar_lea.sflag [#allocation9], %s479
          %s481 = sand.u32 %s211, 1
          %s482 = scalar_lea.vmem [#allocation8], %s481
          %s484 = ssub.s32 16, 16
          %485 = vsyncadd %s480, %s484
          %s486 = smul.addr %s41, 16
          %s487 = scalar_lea.hbm %s6, %s486
          %s489 = sshll.u32 %s482, 4
          %s490 = int_to_ptr.vmem [resolvable:$true] %s489
          %492 = dma.hbm_to_vmem [thread:$0]  %s487, 16, %s490, %s480
        $region44: #{transformer_forward.1} parent=15 // pred_fallthru
          _
        // Predicated region
        $region45: #{transformer_forward.1} parent=15 // pred_check
          %p493 = pneg %p247
        $region46: #{transformer_forward.1} parent=15 // pred_check_branch
          %495 = sbr.rel (%p493) target = $region48
        $region47: #{transformer_forward.1} parent=15 // pred_region
          %s496 = sand.u32 %s33, 1
          %s497 = scalar_lea.sflag [#allocation9], %s496
          %s498 = sand.u32 %s237, 1
          %s499 = scalar_lea.vmem [#allocation10], %s498
          %s501 = ssub.s32 16, 16
          %502 = vsyncadd %s497, %s501
          %s503 = smul.addr %s41, 16
          %s504 = scalar_lea.hbm %s7, %s503
          %s506 = sshll.u32 %s499, 4
          %s507 = int_to_ptr.vmem [resolvable:$true] %s506
          %509 = dma.hbm_to_vmem [thread:$0]  %s504, 16, %s507, %s497
        $region48: #{transformer_forward.1} parent=15 // pred_fallthru
          _
        // Predicated region
        $region49: #{transformer_forward.1} parent=15 // pred_check
          %p510 = pneg %p273
        $region50: #{transformer_forward.1} parent=15 // pred_check_branch
          %512 = sbr.rel (%p510) target = $region52
        $region51: #{transformer_forward.1} parent=15 // pred_region
          %p513 = scmp.lt.s32.totalorder %s41, 1
          %s514 = scalar_select %p513, %s41, 1
          %s515 = smul.addr %s514, 4
          %s516 = smul.addr %s515, 4
          %s517 = scalar_lea.vmem %s8, %s516
        $region52: #{transformer_forward.1} parent=15 // pred_fallthru
          _
        // Predicated region
        $region53: #{transformer_forward.1} parent=15 // pred_check
          %p518 = pneg %p299
        $region54: #{transformer_forward.1} parent=15 // pred_check_branch
          %520 = sbr.rel (%p518) target = $region56
        $region55: #{transformer_forward.1} parent=15 // pred_region
          %s521 = sand.u32 %s33, 1
          %s522 = scalar_lea.sflag [#allocation12], %s521
          %s523 = sand.u32 %s289, 1
          %s524 = scalar_lea.vmem [#allocation11], %s523
          %s526 = ssub.s32 16, 16
          %527 = vsyncadd %s522, %s526
          %s528 = smul.addr %s41, 16
          %s529 = scalar_lea.hbm %s9, %s528
          %s531 = sshll.u32 %s524, 4
          %s532 = int_to_ptr.vmem [resolvable:$true] %s531
          %534 = dma.hbm_to_vmem [thread:$0]  %s529, 16, %s532, %s522
        $region56: #{transformer_forward.1} parent=15 // pred_fallthru
          _
        // Predicated region
        $region57: #{transformer_forward.1} parent=15 // pred_check
          %p535 = pneg %p325
        $region58: #{transformer_forward.1} parent=15 // pred_check_branch
          %537 = sbr.rel (%p535) target = $region60
        $region59: #{transformer_forward.1} parent=15 // pred_region
          %p538 = scmp.lt.s32.totalorder %s41, 1
          %s539 = scalar_select %p538, %s41, 1
          %s540 = smul.addr %s539, 8
          %s541 = smul.addr %s540, 4
          %s542 = scalar_lea.vmem %s10, %s541
        $region60: #{transformer_forward.1} parent=15 // pred_fallthru
          _
        // Predicated region
        $region61: #{transformer_forward.1} parent=15 // pred_check
          %p543 = pneg %p351
        $region62: #{transformer_forward.1} parent=15 // pred_check_branch
          %545 = sbr.rel (%p543) target = $region64
        $region63: #{transformer_forward.1} parent=15 // pred_region
          %s546 = sand.u32 %s33, 1
          %s547 = scalar_lea.sflag [#allocation12], %s546
          %s548 = sand.u32 %s341, 1
          %s549 = scalar_lea.vmem [#allocation13], %s548
          %s551 = ssub.s32 16, 16
          %552 = vsyncadd %s547, %s551
          %s553 = smul.addr %s41, 16
          %s554 = scalar_lea.hbm %s11, %s553
          %s556 = sshll.u32 %s549, 4
          %s557 = int_to_ptr.vmem [resolvable:$true] %s556
          %559 = dma.hbm_to_vmem [thread:$0]  %s554, 16, %s557, %s547
        $region64: #{transformer_forward.1} parent=15 // pred_fallthru
          _
      $region16: #{transformer_forward.1} parent=5 // pred_fallthru
        _
      %p560 = scmp.le.s32.totalorder 1, %s33
      %p561 = scmp.lt.s32.totalorder %s33, 5
      %p562 = pnand %p560, %p561
      %p563 = pneg %p562
      // Predicated region
      $region65: #{transformer_forward.1} parent=5 // pred_check
        _
      $region66: #{transformer_forward.1} parent=5 // pred_check_branch
        %565 = sbr.rel (%p562) target = $region68
      $region67: #{transformer_forward.1} parent=5 // pred_region
        %s566 = ssub.s32 %s33, 1
        %s567 = sand.u32 %s58, 1
        %s568 = scalar_lea.sflag [#allocation3], %s567
        %s569 = sand.u32 %s58, 1
        %s570 = smul.addr %s569, 8
        %s571 = scalar_lea.vmem [#allocation2], %s570
        // Predicated region
        $region69: #{transformer_forward.1} parent=67 // pred_check
          %p572 = pneg %p71
        $region70: #{transformer_forward.1} parent=67 // pred_check_branch
          %574 = sbr.rel (%p572) target = $region72
        $region71: #{transformer_forward.1} parent=67 // pred_region
          %575 = dma.done %s568, 128
        $region72: #{transformer_forward.1} parent=67 // pred_fallthru
          _
        %s576 = sand.u32 %s38, 1
        %s577 = scalar_lea.sflag [#allocation6], %s576
        %s578 = sand.u32 %s110, 1
        %s579 = scalar_lea.vmem [#allocation5], %s578
        // Predicated region
        $region73: #{transformer_forward.1} parent=67 // pred_check
          %p580 = pneg %p123
        $region74: #{transformer_forward.1} parent=67 // pred_check_branch
          %582 = sbr.rel (%p580) target = $region76
        $region75: #{transformer_forward.1} parent=67 // pred_region
          %583 = dma.done %s577, 16
        $region76: #{transformer_forward.1} parent=67 // pred_fallthru
          _
        %s584 = sand.u32 %s38, 1
        %s585 = scalar_lea.sflag [#allocation6], %s584
        %s586 = sand.u32 %s188, 1
        %s587 = scalar_lea.vmem [#allocation7], %s586
        // Predicated region
        $region77: #{transformer_forward.1} parent=67 // pred_check
          %p588 = pneg %p201
        $region78: #{transformer_forward.1} parent=67 // pred_check_branch
          %590 = sbr.rel (%p588) target = $region80
        $region79: #{transformer_forward.1} parent=67 // pred_region
          %591 = dma.done %s585, 16
        $region80: #{transformer_forward.1} parent=67 // pred_fallthru
          _
        %s592 = sand.u32 %s38, 1
        %s593 = scalar_lea.sflag [#allocation9], %s592
        %s594 = sand.u32 %s214, 1
        %s595 = scalar_lea.vmem [#allocation8], %s594
        // Predicated region
        $region81: #{transformer_forward.1} parent=67 // pred_check
          %p596 = pneg %p227
        $region82: #{transformer_forward.1} parent=67 // pred_check_branch
          %598 = sbr.rel (%p596) target = $region84
        $region83: #{transformer_forward.1} parent=67 // pred_region
          %599 = dma.done %s593, 16
        $region84: #{transformer_forward.1} parent=67 // pred_fallthru
          _
        %s600 = sand.u32 %s38, 1
        %s601 = scalar_lea.sflag [#allocation9], %s600
        %s602 = sand.u32 %s240, 1
        %s603 = scalar_lea.vmem [#allocation10], %s602
        // Predicated region
        $region85: #{transformer_forward.1} parent=67 // pred_check
          %p604 = pneg %p253
        $region86: #{transformer_forward.1} parent=67 // pred_check_branch
          %606 = sbr.rel (%p604) target = $region88
        $region87: #{transformer_forward.1} parent=67 // pred_region
          %607 = dma.done %s601, 16
        $region88: #{transformer_forward.1} parent=67 // pred_fallthru
          _
        %s608 = sand.u32 %s38, 1
        %s609 = scalar_lea.sflag [#allocation12], %s608
        %s610 = sand.u32 %s292, 1
        %s611 = scalar_lea.vmem [#allocation11], %s610
        // Predicated region
        $region89: #{transformer_forward.1} parent=67 // pred_check
          %p612 = pneg %p305
        $region90: #{transformer_forward.1} parent=67 // pred_check_branch
          %614 = sbr.rel (%p612) target = $region92
        $region91: #{transformer_forward.1} parent=67 // pred_region
          %615 = dma.done %s609, 16
        $region92: #{transformer_forward.1} parent=67 // pred_fallthru
          _
        %s616 = sand.u32 %s38, 1
        %s617 = scalar_lea.sflag [#allocation12], %s616
        %s618 = sand.u32 %s344, 1
        %s619 = scalar_lea.vmem [#allocation13], %s618
        // Predicated region
        $region93: #{transformer_forward.1} parent=67 // pred_check
          %p620 = pneg %p357
        $region94: #{transformer_forward.1} parent=67 // pred_check_branch
          %622 = sbr.rel (%p620) target = $region96
        $region95: #{transformer_forward.1} parent=67 // pred_region
          %623 = dma.done %s617, 16
        $region96: #{transformer_forward.1} parent=67 // pred_fallthru
          _
        %s624 = sand.u32 %s58, 1
        %s625 = scalar_lea.sflag [#allocation3], %s624
        %s626 = sand.u32 %s58, 1
        %s627 = smul.addr %s626, 8
        %s628 = scalar_lea.vmem [#allocation2], %s627
        %p629 = pneg %p71
        %p630 = pneg %p68
        %p631 = scmp.lt.s32.totalorder %s43, 1
        %s632 = scalar_select %p631, %s43, 1
        %s633 = scalar_lea.vmem %s1, %s632
        %p634 = pneg %p97
        %p635 = pneg %p94
        %s636 = sand.u32 %s38, 1
        %s637 = scalar_lea.sflag [#allocation6], %s636
        %s638 = sand.u32 %s110, 1
        %s639 = scalar_lea.vmem [#allocation5], %s638
        %p640 = pneg %p123
        %p641 = pneg %p120
        %p642 = scmp.lt.s32.totalorder %s43, 1
        %s643 = scalar_select %p642, %s43, 1
        %s644 = smul.addr %s643, 4
        %s645 = smul.addr %s644, 4
        %s646 = scalar_lea.vmem %s3, %s645
        %p647 = pneg %p149
        %p648 = pneg %p146
        %p649 = scmp.lt.s32.totalorder %s43, 1
        %s650 = scalar_select %p649, %s43, 1
        %s651 = smul.addr %s650, 4
        %s652 = smul.addr %s651, 4
        %s653 = scalar_lea.vmem %s4, %s652
        %p654 = pneg %p175
        %p655 = pneg %p172
        %s656 = sand.u32 %s38, 1
        %s657 = scalar_lea.sflag [#allocation6], %s656
        %s658 = sand.u32 %s188, 1
        %s659 = scalar_lea.vmem [#allocation7], %s658
        %p660 = pneg %p201
        %p661 = pneg %p198
        %s662 = sand.u32 %s38, 1
        %s663 = scalar_lea.sflag [#allocation9], %s662
        %s664 = sand.u32 %s214, 1
        %s665 = scalar_lea.vmem [#allocation8], %s664
        %p666 = pneg %p227
        %p667 = pneg %p224
        %s668 = sand.u32 %s38, 1
        %s669 = scalar_lea.sflag [#allocation9], %s668
        %s670 = sand.u32 %s240, 1
        %s671 = scalar_lea.vmem [#allocation10], %s670
        %p672 = pneg %p253
        %p673 = pneg %p250
        %p674 = scmp.lt.s32.totalorder %s43, 1
        %s675 = scalar_select %p674, %s43, 1
        %s676 = smul.addr %s675, 4
        %s677 = smul.addr %s676, 4
        %s678 = scalar_lea.vmem %s8, %s677
        %p679 = pneg %p279
        %p680 = pneg %p276
        %s681 = sand.u32 %s38, 1
        %s682 = scalar_lea.sflag [#allocation12], %s681
        %s683 = sand.u32 %s292, 1
        %s684 = scalar_lea.vmem [#allocation11], %s683
        %p685 = pneg %p305
        %p686 = pneg %p302
        %p687 = scmp.lt.s32.totalorder %s43, 1
        %s688 = scalar_select %p687, %s43, 1
        %s689 = smul.addr %s688, 8
        %s690 = smul.addr %s689, 4
        %s691 = scalar_lea.vmem %s10, %s690
        %p692 = pneg %p331
        %p693 = pneg %p328
        %s694 = sand.u32 %s38, 1
        %s695 = scalar_lea.sflag [#allocation12], %s694
        %s696 = sand.u32 %s344, 1
        %s697 = scalar_lea.vmem [#allocation13], %s696
        %p698 = pneg %p357
        %p699 = pneg %p354
        %p700 = pneg %p383
        %p701 = pneg %p380
        %s702 = sand.u32 %s370, 1
        %s703 = scalar_lea.sflag [#allocation4], %s702
        %s704 = sand.u32 %s370, 1
        %s705 = smul.addr %s704, 8
        %s706 = scalar_lea.vmem [#allocation14], %s705
        %p707 = scmp.lt.s32.totalorder %s43, 1
        %s708 = scalar_select %p707, %s43, 1
        %s709 = scalar_lea.vmem %s1, %s708
        %p710 = scmp.lt.s32.totalorder %s43, 1
        %s711 = scalar_select %p710, %s43, 1
        %s712 = smul.addr %s711, 4
        %s713 = smul.addr %s712, 4
        %s714 = scalar_lea.vmem %s3, %s713
        %p715 = scmp.lt.s32.totalorder %s43, 1
        %s716 = scalar_select %p715, %s43, 1
        %s717 = smul.addr %s716, 4
        %s718 = smul.addr %s717, 4
        %s719 = scalar_lea.vmem %s4, %s718
        %p720 = scmp.lt.s32.totalorder %s43, 1
        %s721 = scalar_select %p720, %s43, 1
        %s722 = smul.addr %s721, 4
        %s723 = smul.addr %s722, 4
        %s724 = scalar_lea.vmem %s8, %s723
        %p725 = scmp.lt.s32.totalorder %s43, 1
        %s726 = scalar_select %p725, %s43, 1
        %s727 = smul.addr %s726, 8
        %s728 = smul.addr %s727, 4
        %s729 = scalar_lea.vmem %s10, %s728
        %p731 = scmp.eq.s32.totalorder %s43, 0
        // Predicated region
        $region97: #{transformer_forward.1} parent=67 // pred_check
          %p732 = pneg %p731
        $region98: #{transformer_forward.1} parent=67 // pred_check_branch
          %734 = sbr.rel (%p732) target = $region100
        $region99: #{transformer_forward.1} parent=67 // pred_region
          %v735 = vld [vmem:[%s571] sm:$0xff]
          %vm736 = vcmask 261120
          %737 = vst.msk [vmem:[%s706] sm:$0xff] %vm736, %v735
        $region100: #{transformer_forward.1} parent=67 // pred_fallthru
          _
        %v738 = vld [vmem:[%s706] sm:$0xff]
        %v739 = vld [vmem:[%s709] sm:$0x1]
        %v740 = vld [vmem:[%s579] sm:$0x1]
        %vm741 = vcmask 261120
        %v742 = vsel %vm741, %v738, 0.0
        %743 = vadd.xlane.f32.xlu0 %v742
        %v744 = vpop.xlane.xlu0 %743
        %v745 = vrcp.pop 32.0
        %v746 = vmul.f32 %v744, %v745
        %v747 = vsub.f32 %v738, %v746
        %v748 = vmul.f32 %v747, %v747
        %v749 = vsel %vm741, %v748, 0.0
        %750 = vadd.xlane.f32.xlu0 %v749
        %v751 = vpop.xlane.xlu0 %750
        %v752 = vmul.f32 %v751, %v745
        %v753 = vadd.f32 %v752, 1e-05
        %v754 = vrsqrt.pop %v753
        %v755 = vmul.f32 %v747, %v754
        %v757 = vlaneseq
        %v758 = vshrl.u32 %v757, 7
        %v759 = vsub.s32 0, %v758
        %v760 = vrot.slane %v739, %v759
        %v762 = vmul.f32 %v755, %v760
        %v764 = vlaneseq
        %v765 = vshrl.u32 %v764, 7
        %v766 = vsub.s32 0, %v765
        %v767 = vrot.slane %v740, %v766
        %v769 = vadd.f32 %v762, %v767
        %v770 = vpack.c.bf16 %v769, %v769
        %v771 = vld [vmem:[%s714] sm:$0xf]
        %v772 = vld [vmem:[%s714 + $0x4] sm:$0xf]
        %v773 = vld [vmem:[%s714 + $0x8] sm:$0xf]
        %v774 = vld [vmem:[%s714 + $0xc] sm:$0xf]
        %v779 = vunpack.c.l.b16 %v771
        %v780 = vunpack.c.l.b16 %v772
        %v781 = vunpack.c.l.b16 %v773
        %v782 = vunpack.c.l.b16 %v774
        %v783 = vpack.c.b16 %v780, %v779
        %v784 = vpack.c.b16 %v782, %v781
        %v788 = vsel %vm741, %v770, 0
        %790 = vmatprep.subr.bf16.mxu0 0
        %791 = vmatpush1.bf16.msra.mxu0 %v783
        %792 = vmatprep.subr.bf16.mxu0 0
        %793 = vmatpush1.bf16.msra.mxu0 %v784
        %794 = vmatprep.subr.bf16.mxu0 0
        %795 = vmatpush1.bf16.msra.mxu0 0
        %796 = vmatprep.subr.bf16.mxu0 0
        %797 = vmatpush1.bf16.msra.mxu0 0
        %798 = vmatprep.subr.bf16.mxu0 0
        %799 = vmatpush1.bf16.msra.mxu0 0
        %800 = vmatprep.subr.bf16.mxu0 0
        %801 = vmatpush1.bf16.msra.mxu0 0
        %802 = vmatprep.subr.bf16.mxu0 0
        %803 = vmatpush1.bf16.msra.mxu0 0
        %804 = vmatprep.subr.bf16.mxu0 0
        %805 = vmatpush1.bf16.msra.mxu0 0
        %806 = vmatprep.subr.bf16.mxu0 0
        %807 = vmatpush1.bf16.msra.mxu0 0
        %808 = vmatprep.subr.bf16.mxu0 0
        %809 = vmatpush1.bf16.msra.mxu0 0
        %810 = vmatprep.subr.bf16.mxu0 0
        %811 = vmatpush1.bf16.msra.mxu0 0
        %812 = vmatprep.subr.bf16.mxu0 0
        %813 = vmatpush1.bf16.msra.mxu0 0
        %814 = vmatprep.subr.bf16.mxu0 0
        %815 = vmatpush1.bf16.msra.mxu0 0
        %816 = vmatprep.subr.bf16.mxu0 0
        %817 = vmatpush1.bf16.msra.mxu0 0
        %818 = vmatprep.subr.bf16.mxu0 0
        %819 = vmatpush1.bf16.msra.mxu0 0
        %820 = vmatprep.subr.bf16.mxu0 0
        %821 = vmatpush1.bf16.msra.mxu0 0
        %822 = vmatprep.mubr.bf16.mxu0 0
        %823 = vmatmul.mubr.bf16.gmra.mrb[0].mxu0 %v788
        %v824 = vpop.f32.mrb[0].mxu0
        %v825 = vadd.f32 0.0, %v824
        %v826 = vpop.f32.mrb[0].mxu0
        %v827 = vpop.f32.mrb[0].mxu0
        %v828 = vpop.f32.mrb[0].mxu0
        %829 = vdwg.mxu0
        %v830 = vmul.f32 %v825, 0.35355338
        %832 = vrot.lane.b32.xlu0 %v830, 120
        %v833 = vpop.permute.xlu0 %832
        %835 = vrot.lane.b32.xlu0 %v830, 112
        %v836 = vpop.permute.xlu0 %835
        %838 = vrot.lane.b32.xlu0 %v830, 104
        %v839 = vpop.permute.xlu0 %838
        %842 = vrot.lane.b32.xlu0 %v825, 120
        %v843 = vpop.permute.xlu0 %842
        %845 = vrot.lane.b32.xlu0 %v825, 112
        %v846 = vpop.permute.xlu0 %845
        %848 = vrot.lane.b32.xlu0 %v825, 104
        %v849 = vpop.permute.xlu0 %848
        %v851 = vpack.c.bf16 %v830, %v830
        %v852 = vpack.c.bf16 %v833, %v833
        %v853 = vpack.c.bf16 %v836, %v836
        %v854 = vpack.c.bf16 %v839, %v839
        %v855 = vpack.c.bf16 %v825, %v825
        %v856 = vpack.c.bf16 %v843, %v843
        %v857 = vpack.c.bf16 %v846, %v846
        %v858 = vpack.c.bf16 %v849, %v849
        %860 = vrot.lane.b32.xlu0 %v855, 96
        %v861 = vpop.permute.xlu0 %860
        %vm862 = vcmask 64512
        %v864 = vsel %vm862, %v851, 0
        %v867 = vsel %vm862, %v861, 0
        %869 = vmatprep.subr.bf16.mxu0 0
        %870 = vmatpush1.bf16.xpose.msra.mxu0 %v867
        %871 = vmatprep.subr.bf16.mxu0 0
        %872 = vmatpush1.bf16.xpose.msra.mxu0 0
        %873 = vmatprep.subr.bf16.mxu0 0
        %874 = vmatpush1.bf16.xpose.msra.mxu0 0
        %875 = vmatprep.subr.bf16.mxu0 0
        %876 = vmatpush1.bf16.xpose.msra.mxu0 0
        %877 = vmatprep.subr.bf16.mxu0 0
        %878 = vmatpush1.bf16.xpose.msra.mxu0 0
        %879 = vmatprep.subr.bf16.mxu0 0
        %880 = vmatpush1.bf16.xpose.msra.mxu0 0
        %881 = vmatprep.subr.bf16.mxu0 0
        %882 = vmatpush1.bf16.xpose.msra.mxu0 0
        %883 = vmatprep.subr.bf16.mxu0 0
        %884 = vmatpush1.bf16.xpose.msra.mxu0 0
        %885 = vmatprep.subr.bf16.mxu0 0
        %886 = vmatpush1.bf16.xpose.msra.mxu0 0
        %887 = vmatprep.subr.bf16.mxu0 0
        %888 = vmatpush1.bf16.xpose.msra.mxu0 0
        %889 = vmatprep.subr.bf16.mxu0 0
        %890 = vmatpush1.bf16.xpose.msra.mxu0 0
        %891 = vmatprep.subr.bf16.mxu0 0
        %892 = vmatpush1.bf16.xpose.msra.mxu0 0
        %893 = vmatprep.subr.bf16.mxu0 0
        %894 = vmatpush1.bf16.xpose.msra.mxu0 0
        %895 = vmatprep.subr.bf16.mxu0 0
        %896 = vmatpush1.bf16.xpose.msra.mxu0 0
        %897 = vmatprep.subr.bf16.mxu0 0
        %898 = vmatpush1.bf16.xpose.msra.mxu0 0
        %899 = vmatprep.subr.bf16.mxu0 0
        %900 = vmatpush1.bf16.xpose.msra.mxu0 0
        %901 = vmatprep.mubr.bf16.mxu0 0
        %902 = vmatmul.mubr.bf16.gmra.mrb[0].mxu0 %v864
        %v903 = vpop.f32.mrb[0].mxu0
        %v904 = vadd.f32 0.0, %v903
        %v905 = vpop.f32.mrb[0].mxu0
        %v906 = vpop.f32.mrb[0].mxu0
        %v907 = vpop.f32.mrb[0].mxu0
        %908 = vdwg.mxu0
        %910 = vrot.lane.b32.xlu0 %v856, 96
        %v911 = vpop.permute.xlu0 %910
        %v913 = vsel %vm862, %v852, 0
        %v916 = vsel %vm862, %v911, 0
        %918 = vmatprep.subr.bf16.mxu0 0
        %919 = vmatpush1.bf16.xpose.msra.mxu0 %v916
        %920 = vmatprep.subr.bf16.mxu0 0
        %921 = vmatpush1.bf16.xpose.msra.mxu0 0
        %922 = vmatprep.subr.bf16.mxu0 0
        %923 = vmatpush1.bf16.xpose.msra.mxu0 0
        %924 = vmatprep.subr.bf16.mxu0 0
        %925 = vmatpush1.bf16.xpose.msra.mxu0 0
        %926 = vmatprep.subr.bf16.mxu0 0
        %927 = vmatpush1.bf16.xpose.msra.mxu0 0
        %928 = vmatprep.subr.bf16.mxu0 0
        %929 = vmatpush1.bf16.xpose.msra.mxu0 0
        %930 = vmatprep.subr.bf16.mxu0 0
        %931 = vmatpush1.bf16.xpose.msra.mxu0 0
        %932 = vmatprep.subr.bf16.mxu0 0
        %933 = vmatpush1.bf16.xpose.msra.mxu0 0
        %934 = vmatprep.subr.bf16.mxu0 0
        %935 = vmatpush1.bf16.xpose.msra.mxu0 0
        %936 = vmatprep.subr.bf16.mxu0 0
        %937 = vmatpush1.bf16.xpose.msra.mxu0 0
        %938 = vmatprep.subr.bf16.mxu0 0
        %939 = vmatpush1.bf16.xpose.msra.mxu0 0
        %940 = vmatprep.subr.bf16.mxu0 0
        %941 = vmatpush1.bf16.xpose.msra.mxu0 0
        %942 = vmatprep.subr.bf16.mxu0 0
        %943 = vmatpush1.bf16.xpose.msra.mxu0 0
        %944 = vmatprep.subr.bf16.mxu0 0
        %945 = vmatpush1.bf16.xpose.msra.mxu0 0
        %946 = vmatprep.subr.bf16.mxu0 0
        %947 = vmatpush1.bf16.xpose.msra.mxu0 0
        %948 = vmatprep.subr.bf16.mxu0 0
        %949 = vmatpush1.bf16.xpose.msra.mxu0 0
        %950 = vmatprep.mubr.bf16.mxu0 0
        %951 = vmatmul.mubr.bf16.gmra.mrb[0].mxu0 %v913
        %v952 = vpop.f32.mrb[0].mxu0
        %v953 = vadd.f32 0.0, %v952
        %v954 = vpop.f32.mrb[0].mxu0
        %v955 = vpop.f32.mrb[0].mxu0
        %v956 = vpop.f32.mrb[0].mxu0
        %957 = vdwg.mxu0
        %959 = vrot.lane.b32.xlu0 %v857, 96
        %v960 = vpop.permute.xlu0 %959
        %v962 = vsel %vm862, %v853, 0
        %v965 = vsel %vm862, %v960, 0
        %967 = vmatprep.subr.bf16.mxu0 0
        %968 = vmatpush1.bf16.xpose.msra.mxu0 %v965
        %969 = vmatprep.subr.bf16.mxu0 0
        %970 = vmatpush1.bf16.xpose.msra.mxu0 0
        %971 = vmatprep.subr.bf16.mxu0 0
        %972 = vmatpush1.bf16.xpose.msra.mxu0 0
        %973 = vmatprep.subr.bf16.mxu0 0
        %974 = vmatpush1.bf16.xpose.msra.mxu0 0
        %975 = vmatprep.subr.bf16.mxu0 0
        %976 = vmatpush1.bf16.xpose.msra.mxu0 0
        %977 = vmatprep.subr.bf16.mxu0 0
        %978 = vmatpush1.bf16.xpose.msra.mxu0 0
        %979 = vmatprep.subr.bf16.mxu0 0
        %980 = vmatpush1.bf16.xpose.msra.mxu0 0
        %981 = vmatprep.subr.bf16.mxu0 0
        %982 = vmatpush1.bf16.xpose.msra.mxu0 0
        %983 = vmatprep.subr.bf16.mxu0 0
        %984 = vmatpush1.bf16.xpose.msra.mxu0 0
        %985 = vmatprep.subr.bf16.mxu0 0
        %986 = vmatpush1.bf16.xpose.msra.mxu0 0
        %987 = vmatprep.subr.bf16.mxu0 0
        %988 = vmatpush1.bf16.xpose.msra.mxu0 0
        %989 = vmatprep.subr.bf16.mxu0 0
        %990 = vmatpush1.bf16.xpose.msra.mxu0 0
        %991 = vmatprep.subr.bf16.mxu0 0
        %992 = vmatpush1.bf16.xpose.msra.mxu0 0
        %993 = vmatprep.subr.bf16.mxu0 0
        %994 = vmatpush1.bf16.xpose.msra.mxu0 0
        %995 = vmatprep.subr.bf16.mxu0 0
        %996 = vmatpush1.bf16.xpose.msra.mxu0 0
        %997 = vmatprep.subr.bf16.mxu0 0
        %998 = vmatpush1.bf16.xpose.msra.mxu0 0
        %999 = vmatprep.mubr.bf16.mxu0 0
        %1000 = vmatmul.mubr.bf16.gmra.mrb[0].mxu0 %v962
        %v1001 = vpop.f32.mrb[0].mxu0
        %v1002 = vadd.f32 0.0, %v1001
        %v1003 = vpop.f32.mrb[0].mxu0
        %v1004 = vpop.f32.mrb[0].mxu0
        %v1005 = vpop.f32.mrb[0].mxu0
        %1006 = vdwg.mxu0
        %1008 = vrot.lane.b32.xlu0 %v858, 96
        %v1009 = vpop.permute.xlu0 %1008
        %v1011 = vsel %vm862, %v854, 0
        %v1014 = vsel %vm862, %v1009, 0
        %1016 = vmatprep.subr.bf16.mxu0 0
        %1017 = vmatpush1.bf16.xpose.msra.mxu0 %v1014
        %1018 = vmatprep.subr.bf16.mxu0 0
        %1019 = vmatpush1.bf16.xpose.msra.mxu0 0
        %1020 = vmatprep.subr.bf16.mxu0 0
        %1021 = vmatpush1.bf16.xpose.msra.mxu0 0
        %1022 = vmatprep.subr.bf16.mxu0 0
        %1023 = vmatpush1.bf16.xpose.msra.mxu0 0
        %1024 = vmatprep.subr.bf16.mxu0 0
        %1025 = vmatpush1.bf16.xpose.msra.mxu0 0
        %1026 = vmatprep.subr.bf16.mxu0 0
        %1027 = vmatpush1.bf16.xpose.msra.mxu0 0
        %1028 = vmatprep.subr.bf16.mxu0 0
        %1029 = vmatpush1.bf16.xpose.msra.mxu0 0
        %1030 = vmatprep.subr.bf16.mxu0 0
        %1031 = vmatpush1.bf16.xpose.msra.mxu0 0
        %1032 = vmatprep.subr.bf16.mxu0 0
        %1033 = vmatpush1.bf16.xpose.msra.mxu0 0
        %1034 = vmatprep.subr.bf16.mxu0 0
        %1035 = vmatpush1.bf16.xpose.msra.mxu0 0
        %1036 = vmatprep.subr.bf16.mxu0 0
        %1037 = vmatpush1.bf16.xpose.msra.mxu0 0
        %1038 = vmatprep.subr.bf16.mxu0 0
        %1039 = vmatpush1.bf16.xpose.msra.mxu0 0
        %1040 = vmatprep.subr.bf16.mxu0 0
        %1041 = vmatpush1.bf16.xpose.msra.mxu0 0
        %1042 = vmatprep.subr.bf16.mxu0 0
        %1043 = vmatpush1.bf16.xpose.msra.mxu0 0
        %1044 = vmatprep.subr.bf16.mxu0 0
        %1045 = vmatpush1.bf16.xpose.msra.mxu0 0
        %1046 = vmatprep.subr.bf16.mxu0 0
        %1047 = vmatpush1.bf16.xpose.msra.mxu0 0
        %1048 = vmatprep.mubr.bf16.mxu0 0
        %1049 = vmatmul.mubr.bf16.gmra.mrb[0].mxu0 %v1011
        %v1050 = vpop.f32.mrb[0].mxu0
        %v1051 = vadd.f32 0.0, %v1050
        %v1052 = vpop.f32.mrb[0].mxu0
        %v1053 = vpop.f32.mrb[0].mxu0
        %v1054 = vpop.f32.mrb[0].mxu0
        %1055 = vdwg.mxu0
        %v1056 = vsel %vm862, %v904, -inf
        %1057 = vmax.xlane.f32.xlu0 %v1056
        %v1058 = vpop.xlane.xlu0 %1057
        %v1059 = vsel %vm862, %v953, -inf
        %1060 = vmax.xlane.f32.xlu0 %v1059
        %v1061 = vpop.xlane.xlu0 %1060
        %v1062 = vsel %vm862, %v1002, -inf
        %1063 = vmax.xlane.f32.xlu0 %v1062
        %v1064 = vpop.xlane.xlu0 %1063
        %v1065 = vsel %vm862, %v1051, -inf
        %1066 = vmax.xlane.f32.xlu0 %v1065
        %v1067 = vpop.xlane.xlu0 %1066
        %v1068 = vsub.f32 %v904, %v1058
        %v1069 = vsub.f32 %v953, %v1061
        %v1070 = vsub.f32 %v1002, %v1064
        %v1071 = vsub.f32 %v1051, %v1067
        %v1072 = vmul.f32 %v1068, 1.442695
        %v1073 = vpow.pop %v1072
        %v1074 = vmul.f32 %v1069, 1.442695
        %v1075 = vpow.pop %v1074
        %v1076 = vmul.f32 %v1070, 1.442695
        %v1077 = vpow.pop %v1076
        %v1078 = vmul.f32 %v1071, 1.442695
        %v1079 = vpow.pop %v1078
        %v1080 = vsel %vm862, %v1073, 0.0
        %1081 = vadd.xlane.f32.xlu0 %v1080
        %v1082 = vpop.xlane.xlu0 %1081
        %v1083 = vsel %vm862, %v1075, 0.0
        %1084 = vadd.xlane.f32.xlu0 %v1083
        %v1085 = vpop.xlane.xlu0 %1084
        %v1086 = vsel %vm862, %v1077, 0.0
        %1087 = vadd.xlane.f32.xlu0 %v1086
        %v1088 = vpop.xlane.xlu0 %1087
        %v1089 = vsel %vm862, %v1079, 0.0
        %1090 = vadd.xlane.f32.xlu0 %v1089
        %v1091 = vpop.xlane.xlu0 %1090
        %v1092 = vrcp.pop %v1082
        %v1093 = vrcp.pop %v1085
        %v1094 = vrcp.pop %v1088
        %v1095 = vrcp.pop %v1091
        %v1096 = vmul.f32 %v1073, %v1092
        %v1097 = vmul.f32 %v1075, %v1093
        %v1098 = vmul.f32 %v1077, %v1094
        %v1099 = vmul.f32 %v1079, %v1095
        %v1100 = vpack.c.bf16 %v1096, %v1096
        %v1101 = vpack.c.bf16 %v1097, %v1097
        %v1102 = vpack.c.bf16 %v1098, %v1098
        %v1103 = vpack.c.bf16 %v1099, %v1099
        %1104 = vrot.lane.b32.xlu0 %v855, 64
        %v1105 = vpop.permute.xlu0 %1104
        %v1107 = vsel %vm862, %v1100, 0
        %vm1109 = vcmask 1043456
        %v1111 = vsel %vm1109, %v1105, 0
        %1113 = vmatprep.subr.bf16.mxu0 0
        %1114 = vmatpush1.bf16.msra.mxu0 %v1111
        %1115 = vmatprep.subr.bf16.mxu0 0
        %1116 = vmatpush1.bf16.msra.mxu0 0
        %1117 = vmatprep.subr.bf16.mxu0 0
        %1118 = vmatpush1.bf16.msra.mxu0 0
        %1119 = vmatprep.subr.bf16.mxu0 0
        %1120 = vmatpush1.bf16.msra.mxu0 0
        %1121 = vmatprep.subr.bf16.mxu0 0
        %1122 = vmatpush1.bf16.msra.mxu0 0
        %1123 = vmatprep.subr.bf16.mxu0 0
        %1124 = vmatpush1.bf16.msra.mxu0 0
        %1125 = vmatprep.subr.bf16.mxu0 0
        %1126 = vmatpush1.bf16.msra.mxu0 0
        %1127 = vmatprep.subr.bf16.mxu0 0
        %1128 = vmatpush1.bf16.msra.mxu0 0
        %1129 = vmatprep.subr.bf16.mxu0 0
        %1130 = vmatpush1.bf16.msra.mxu0 0
        %1131 = vmatprep.subr.bf16.mxu0 0
        %1132 = vmatpush1.bf16.msra.mxu0 0
        %1133 = vmatprep.subr.bf16.mxu0 0
        %1134 = vmatpush1.bf16.msra.mxu0 0
        %1135 = vmatprep.subr.bf16.mxu0 0
        %1136 = vmatpush1.bf16.msra.mxu0 0
        %1137 = vmatprep.subr.bf16.mxu0 0
        %1138 = vmatpush1.bf16.msra.mxu0 0
        %1139 = vmatprep.subr.bf16.mxu0 0
        %1140 = vmatpush1.bf16.msra.mxu0 0
        %1141 = vmatprep.subr.bf16.mxu0 0
        %1142 = vmatpush1.bf16.msra.mxu0 0
        %1143 = vmatprep.subr.bf16.mxu0 0
        %1144 = vmatpush1.bf16.msra.mxu0 0
        %1145 = vmatprep.mubr.bf16.mxu0 0
        %1146 = vmatmul.mubr.bf16.gmra.mrb[0].mxu0 %v1107
        %v1147 = vpop.f32.mrb[0].mxu0
        %v1148 = vadd.f32 0.0, %v1147
        %v1149 = vpop.f32.mrb[0].mxu0
        %v1150 = vpop.f32.mrb[0].mxu0
        %v1151 = vpop.f32.mrb[0].mxu0
        %1152 = vdwg.mxu0
        %1153 = vrot.lane.b32.xlu0 %v856, 64
        %v1154 = vpop.permute.xlu0 %1153
        %v1156 = vsel %vm862, %v1101, 0
        %v1159 = vsel %vm1109, %v1154, 0
        %1161 = vmatprep.subr.bf16.mxu0 0
        %1162 = vmatpush1.bf16.msra.mxu0 %v1159
        %1163 = vmatprep.subr.bf16.mxu0 0
        %1164 = vmatpush1.bf16.msra.mxu0 0
        %1165 = vmatprep.subr.bf16.mxu0 0
        %1166 = vmatpush1.bf16.msra.mxu0 0
        %1167 = vmatprep.subr.bf16.mxu0 0
        %1168 = vmatpush1.bf16.msra.mxu0 0
        %1169 = vmatprep.subr.bf16.mxu0 0
        %1170 = vmatpush1.bf16.msra.mxu0 0
        %1171 = vmatprep.subr.bf16.mxu0 0
        %1172 = vmatpush1.bf16.msra.mxu0 0
        %1173 = vmatprep.subr.bf16.mxu0 0
        %1174 = vmatpush1.bf16.msra.mxu0 0
        %1175 = vmatprep.subr.bf16.mxu0 0
        %1176 = vmatpush1.bf16.msra.mxu0 0
        %1177 = vmatprep.subr.bf16.mxu0 0
        %1178 = vmatpush1.bf16.msra.mxu0 0
        %1179 = vmatprep.subr.bf16.mxu0 0
        %1180 = vmatpush1.bf16.msra.mxu0 0
        %1181 = vmatprep.subr.bf16.mxu0 0
        %1182 = vmatpush1.bf16.msra.mxu0 0
        %1183 = vmatprep.subr.bf16.mxu0 0
        %1184 = vmatpush1.bf16.msra.mxu0 0
        %1185 = vmatprep.subr.bf16.mxu0 0
        %1186 = vmatpush1.bf16.msra.mxu0 0
        %1187 = vmatprep.subr.bf16.mxu0 0
        %1188 = vmatpush1.bf16.msra.mxu0 0
        %1189 = vmatprep.subr.bf16.mxu0 0
        %1190 = vmatpush1.bf16.msra.mxu0 0
        %1191 = vmatprep.subr.bf16.mxu0 0
        %1192 = vmatpush1.bf16.msra.mxu0 0
        %1193 = vmatprep.mubr.bf16.mxu0 0
        %1194 = vmatmul.mubr.bf16.gmra.mrb[0].mxu0 %v1156
        %v1195 = vpop.f32.mrb[0].mxu0
        %v1196 = vadd.f32 0.0, %v1195
        %v1197 = vpop.f32.mrb[0].mxu0
        %v1198 = vpop.f32.mrb[0].mxu0
        %v1199 = vpop.f32.mrb[0].mxu0
        %1200 = vdwg.mxu0
        %1201 = vrot.lane.b32.xlu0 %v857, 64
        %v1202 = vpop.permute.xlu0 %1201
        %v1204 = vsel %vm862, %v1102, 0
        %v1207 = vsel %vm1109, %v1202, 0
        %1209 = vmatprep.subr.bf16.mxu0 0
        %1210 = vmatpush1.bf16.msra.mxu0 %v1207
        %1211 = vmatprep.subr.bf16.mxu0 0
        %1212 = vmatpush1.bf16.msra.mxu0 0
        %1213 = vmatprep.subr.bf16.mxu0 0
        %1214 = vmatpush1.bf16.msra.mxu0 0
        %1215 = vmatprep.subr.bf16.mxu0 0
        %1216 = vmatpush1.bf16.msra.mxu0 0
        %1217 = vmatprep.subr.bf16.mxu0 0
        %1218 = vmatpush1.bf16.msra.mxu0 0
        %1219 = vmatprep.subr.bf16.mxu0 0
        %1220 = vmatpush1.bf16.msra.mxu0 0
        %1221 = vmatprep.subr.bf16.mxu0 0
        %1222 = vmatpush1.bf16.msra.mxu0 0
        %1223 = vmatprep.subr.bf16.mxu0 0
        %1224 = vmatpush1.bf16.msra.mxu0 0
        %1225 = vmatprep.subr.bf16.mxu0 0
        %1226 = vmatpush1.bf16.msra.mxu0 0
        %1227 = vmatprep.subr.bf16.mxu0 0
        %1228 = vmatpush1.bf16.msra.mxu0 0
        %1229 = vmatprep.subr.bf16.mxu0 0
        %1230 = vmatpush1.bf16.msra.mxu0 0
        %1231 = vmatprep.subr.bf16.mxu0 0
        %1232 = vmatpush1.bf16.msra.mxu0 0
        %1233 = vmatprep.subr.bf16.mxu0 0
        %1234 = vmatpush1.bf16.msra.mxu0 0
        %1235 = vmatprep.subr.bf16.mxu0 0
        %1236 = vmatpush1.bf16.msra.mxu0 0
        %1237 = vmatprep.subr.bf16.mxu0 0
        %1238 = vmatpush1.bf16.msra.mxu0 0
        %1239 = vmatprep.subr.bf16.mxu0 0
        %1240 = vmatpush1.bf16.msra.mxu0 0
        %1241 = vmatprep.mubr.bf16.mxu0 0
        %1242 = vmatmul.mubr.bf16.gmra.mrb[0].mxu0 %v1204
        %v1243 = vpop.f32.mrb[0].mxu0
        %v1244 = vadd.f32 0.0, %v1243
        %v1245 = vpop.f32.mrb[0].mxu0
        %v1246 = vpop.f32.mrb[0].mxu0
        %v1247 = vpop.f32.mrb[0].mxu0
        %1248 = vdwg.mxu0
        %1249 = vrot.lane.b32.xlu0 %v858, 64
        %v1250 = vpop.permute.xlu0 %1249
        %v1252 = vsel %vm862, %v1103, 0
        %v1255 = vsel %vm1109, %v1250, 0
        %1257 = vmatprep.subr.bf16.mxu0 0
        %1258 = vmatpush1.bf16.msra.mxu0 %v1255
        %1259 = vmatprep.subr.bf16.mxu0 0
        %1260 = vmatpush1.bf16.msra.mxu0 0
        %1261 = vmatprep.subr.bf16.mxu0 0
        %1262 = vmatpush1.bf16.msra.mxu0 0
        %1263 = vmatprep.subr.bf16.mxu0 0
        %1264 = vmatpush1.bf16.msra.mxu0 0
        %1265 = vmatprep.subr.bf16.mxu0 0
        %1266 = vmatpush1.bf16.msra.mxu0 0
        %1267 = vmatprep.subr.bf16.mxu0 0
        %1268 = vmatpush1.bf16.msra.mxu0 0
        %1269 = vmatprep.subr.bf16.mxu0 0
        %1270 = vmatpush1.bf16.msra.mxu0 0
        %1271 = vmatprep.subr.bf16.mxu0 0
        %1272 = vmatpush1.bf16.msra.mxu0 0
        %1273 = vmatprep.subr.bf16.mxu0 0
        %1274 = vmatpush1.bf16.msra.mxu0 0
        %1275 = vmatprep.subr.bf16.mxu0 0
        %1276 = vmatpush1.bf16.msra.mxu0 0
        %1277 = vmatprep.subr.bf16.mxu0 0
        %1278 = vmatpush1.bf16.msra.mxu0 0
        %1279 = vmatprep.subr.bf16.mxu0 0
        %1280 = vmatpush1.bf16.msra.mxu0 0
        %1281 = vmatprep.subr.bf16.mxu0 0
        %1282 = vmatpush1.bf16.msra.mxu0 0
        %1283 = vmatprep.subr.bf16.mxu0 0
        %1284 = vmatpush1.bf16.msra.mxu0 0
        %1285 = vmatprep.subr.bf16.mxu0 0
        %1286 = vmatpush1.bf16.msra.mxu0 0
        %1287 = vmatprep.subr.bf16.mxu0 0
        %1288 = vmatpush1.bf16.msra.mxu0 0
        %1289 = vmatprep.mubr.bf16.mxu0 0
        %1290 = vmatmul.mubr.bf16.gmra.mrb[0].mxu0 %v1252
        %v1291 = vpop.f32.mrb[0].mxu0
        %v1292 = vadd.f32 0.0, %v1291
        %v1293 = vpop.f32.mrb[0].mxu0
        %v1294 = vpop.f32.mrb[0].mxu0
        %v1295 = vpop.f32.mrb[0].mxu0
        %1296 = vdwg.mxu0
        %1298 = vrot.lane.b32.xlu0 %v1196, 8
        %v1299 = vpop.permute.xlu0 %1298
        %1302 = vrot.lane.b32.xlu0 %v1244, 16
        %v1303 = vpop.permute.xlu0 %1302
        %1306 = vrot.lane.b32.xlu0 %v1292, 24
        %v1307 = vpop.permute.xlu0 %1306
        %v1309 = vsel %vm862, %v1148, %v1299
        %vm1310 = vcmask 130048
        %v1311 = vsel %vm1310, %v1309, %v1303
        %vm1312 = vcmask 195584
        %v1313 = vsel %vm1312, %v1311, %v1307
        %v1314 = vpack.c.bf16 %v1313, %v1313
        %v1315 = vld [vmem:[%s719] sm:$0xf]
        %v1316 = vld [vmem:[%s719 + $0x4] sm:$0xf]
        %v1317 = vld [vmem:[%s719 + $0x8] sm:$0xf]
        %v1318 = vld [vmem:[%s719 + $0xc] sm:$0xf]
        %v1319 = vld [vmem:[%s587] sm:$0x1]
        %v1321 = vlaneseq
        %v1322 = vshrl.u32 %v1321, 7
        %v1323 = vsub.s32 0, %v1322
        %v1324 = vrot.slane %v1319, %v1323
        %v1330 = vunpack.c.l.b16 %v1315
        %v1331 = vunpack.c.l.b16 %v1316
        %v1332 = vunpack.c.l.b16 %v1317
        %v1333 = vunpack.c.l.b16 %v1318
        %v1334 = vpack.c.b16 %v1331, %v1330
        %v1335 = vpack.c.b16 %v1333, %v1332
        %v1339 = vsel %vm741, %v1314, 0
        %1341 = vmatprep.subr.bf16.mxu0 0
        %1342 = vmatpush1.bf16.msra.mxu0 %v1334
        %1343 = vmatprep.subr.bf16.mxu0 0
        %1344 = vmatpush1.bf16.msra.mxu0 %v1335
        %1345 = vmatprep.subr.bf16.mxu0 0
        %1346 = vmatpush1.bf16.msra.mxu0 0
        %1347 = vmatprep.subr.bf16.mxu0 0
        %1348 = vmatpush1.bf16.msra.mxu0 0
        %1349 = vmatprep.subr.bf16.mxu0 0
        %1350 = vmatpush1.bf16.msra.mxu0 0
        %1351 = vmatprep.subr.bf16.mxu0 0
        %1352 = vmatpush1.bf16.msra.mxu0 0
        %1353 = vmatprep.subr.bf16.mxu0 0
        %1354 = vmatpush1.bf16.msra.mxu0 0
        %1355 = vmatprep.subr.bf16.mxu0 0
        %1356 = vmatpush1.bf16.msra.mxu0 0
        %1357 = vmatprep.subr.bf16.mxu0 0
        %1358 = vmatpush1.bf16.msra.mxu0 0
        %1359 = vmatprep.subr.bf16.mxu0 0
        %1360 = vmatpush1.bf16.msra.mxu0 0
        %1361 = vmatprep.subr.bf16.mxu0 0
        %1362 = vmatpush1.bf16.msra.mxu0 0
        %1363 = vmatprep.subr.bf16.mxu0 0
        %1364 = vmatpush1.bf16.msra.mxu0 0
        %1365 = vmatprep.subr.bf16.mxu0 0
        %1366 = vmatpush1.bf16.msra.mxu0 0
        %1367 = vmatprep.subr.bf16.mxu0 0
        %1368 = vmatpush1.bf16.msra.mxu0 0
        %1369 = vmatprep.subr.bf16.mxu0 0
        %1370 = vmatpush1.bf16.msra.mxu0 0
        %1371 = vmatprep.subr.bf16.mxu0 0
        %1372 = vmatpush1.bf16.msra.mxu0 0
        %1373 = vmatprep.mubr.bf16.mxu0 0
        %1374 = vmatmul.mubr.bf16.gmra.mrb[0].mxu0 %v1339
        %v1375 = vpop.f32.mrb[0].mxu0
        %v1376 = vadd.f32 %v1324, %v1375
        %v1377 = vpop.f32.mrb[0].mxu0
        %v1378 = vpop.f32.mrb[0].mxu0
        %v1379 = vpop.f32.mrb[0].mxu0
        %1380 = vdwg.mxu0
        %v1381 = vadd.f32 %v1376, %v738
        %v1382 = vld [vmem:[%s595] sm:$0x1]
        %v1383 = vld [vmem:[%s603] sm:$0x1]
        %v1384 = vsel %vm741, %v1381, 0.0
        %1385 = vadd.xlane.f32.xlu0 %v1384
        %v1386 = vpop.xlane.xlu0 %1385
        %v1387 = vmul.f32 %v1386, %v745
        %v1388 = vsub.f32 %v1381, %v1387
        %v1389 = vmul.f32 %v1388, %v1388
        %v1390 = vsel %vm741, %v1389, 0.0
        %1391 = vadd.xlane.f32.xlu0 %v1390
        %v1392 = vpop.xlane.xlu0 %1391
        %v1393 = vmul.f32 %v1392, %v745
        %v1394 = vadd.f32 %v1393, 1e-05
        %v1395 = vrsqrt.pop %v1394
        %v1396 = vmul.f32 %v1388, %v1395
        %v1398 = vlaneseq
        %v1399 = vshrl.u32 %v1398, 7
        %v1400 = vsub.s32 0, %v1399
        %v1401 = vrot.slane %v1382, %v1400
        %v1403 = vmul.f32 %v1396, %v1401
        %v1405 = vlaneseq
        %v1406 = vshrl.u32 %v1405, 7
        %v1407 = vsub.s32 0, %v1406
        %v1408 = vrot.slane %v1383, %v1407
        %v1410 = vadd.f32 %v1403, %v1408
        %v1411 = vpack.c.bf16 %v1410, %v1410
        %v1412 = vld [vmem:[%s724] sm:$0xf]
        %v1413 = vld [vmem:[%s724 + $0x4] sm:$0xf]
        %v1414 = vld [vmem:[%s724 + $0x8] sm:$0xf]
        %v1415 = vld [vmem:[%s724 + $0xc] sm:$0xf]
        %v1416 = vld [vmem:[%s611] sm:$0x1]
        %v1418 = vlaneseq
        %v1419 = vshrl.u32 %v1418, 7
        %v1420 = vsub.s32 0, %v1419
        %v1421 = vrot.slane %v1416, %v1420
        %v1427 = vunpack.c.l.b16 %v1412
        %v1428 = vunpack.c.l.b16 %v1413
        %v1429 = vunpack.c.l.b16 %v1414
        %v1430 = vunpack.c.l.b16 %v1415
        %v1431 = vpack.c.b16 %v1428, %v1427
        %v1432 = vpack.c.b16 %v1430, %v1429
        %v1436 = vsel %vm741, %v1411, 0
        %1438 = vmatprep.subr.bf16.mxu0 0
        %1439 = vmatpush1.bf16.msra.mxu0 %v1431
        %1440 = vmatprep.subr.bf16.mxu0 0
        %1441 = vmatpush1.bf16.msra.mxu0 %v1432
        %1442 = vmatprep.subr.bf16.mxu0 0
        %1443 = vmatpush1.bf16.msra.mxu0 0
        %1444 = vmatprep.subr.bf16.mxu0 0
        %1445 = vmatpush1.bf16.msra.mxu0 0
        %1446 = vmatprep.subr.bf16.mxu0 0
        %1447 = vmatpush1.bf16.msra.mxu0 0
        %1448 = vmatprep.subr.bf16.mxu0 0
        %1449 = vmatpush1.bf16.msra.mxu0 0
        %1450 = vmatprep.subr.bf16.mxu0 0
        %1451 = vmatpush1.bf16.msra.mxu0 0
        %1452 = vmatprep.subr.bf16.mxu0 0
        %1453 = vmatpush1.bf16.msra.mxu0 0
        %1454 = vmatprep.subr.bf16.mxu0 0
        %1455 = vmatpush1.bf16.msra.mxu0 0
        %1456 = vmatprep.subr.bf16.mxu0 0
        %1457 = vmatpush1.bf16.msra.mxu0 0
        %1458 = vmatprep.subr.bf16.mxu0 0
        %1459 = vmatpush1.bf16.msra.mxu0 0
        %1460 = vmatprep.subr.bf16.mxu0 0
        %1461 = vmatpush1.bf16.msra.mxu0 0
        %1462 = vmatprep.subr.bf16.mxu0 0
        %1463 = vmatpush1.bf16.msra.mxu0 0
        %1464 = vmatprep.subr.bf16.mxu0 0
        %1465 = vmatpush1.bf16.msra.mxu0 0
        %1466 = vmatprep.subr.bf16.mxu0 0
        %1467 = vmatpush1.bf16.msra.mxu0 0
        %1468 = vmatprep.subr.bf16.mxu0 0
        %1469 = vmatpush1.bf16.msra.mxu0 0
        %1470 = vmatprep.mubr.bf16.mxu0 0
        %1471 = vmatmul.mubr.bf16.gmra.mrb[0].mxu0 %v1436
        %v1472 = vpop.f32.mrb[0].mxu0
        %v1473 = vadd.f32 %v1421, %v1472
        %v1474 = vpop.f32.mrb[0].mxu0
        %v1475 = vpop.f32.mrb[0].mxu0
        %v1476 = vpop.f32.mrb[0].mxu0
        %1477 = vdwg.mxu0
        %v1478 = vmul.f32 %v1473, 0.5
        %v1479 = vmul.f32 %v1473, 0.70710677
        %v1480 = verf.f32.pop %v1479
        %v1481 = vadd.f32 %v1480, 1.0
        %v1482 = vmul.f32 %v1478, %v1481
        %v1483 = vpack.c.bf16 %v1482, %v1482
        %v1484 = vld [vmem:[%s729] sm:$0xf]
        %v1485 = vld [vmem:[%s729 + $0x4] sm:$0xf]
        %v1486 = vld [vmem:[%s729 + $0x8] sm:$0xf]
        %v1487 = vld [vmem:[%s729 + $0xc] sm:$0xf]
        %v1488 = vld [vmem:[%s729 + $0x10] sm:$0xf]
        %v1489 = vld [vmem:[%s729 + $0x14] sm:$0xf]
        %v1490 = vld [vmem:[%s729 + $0x18] sm:$0xf]
        %v1491 = vld [vmem:[%s729 + $0x1c] sm:$0xf]
        %v1492 = vld [vmem:[%s619] sm:$0x1]
        %v1494 = vlaneseq
        %v1495 = vshrl.u32 %v1494, 7
        %v1496 = vsub.s32 0, %v1495
        %v1497 = vrot.slane %v1492, %v1496
        %v1507 = vunpack.c.l.b16 %v1484
        %v1508 = vunpack.c.l.b16 %v1485
        %v1509 = vunpack.c.l.b16 %v1486
        %v1510 = vunpack.c.l.b16 %v1487
        %v1511 = vunpack.c.l.b16 %v1488
        %v1512 = vunpack.c.l.b16 %v1489
        %v1513 = vunpack.c.l.b16 %v1490
        %v1514 = vunpack.c.l.b16 %v1491
        %v1515 = vpack.c.b16 %v1508, %v1507
        %v1516 = vpack.c.b16 %v1510, %v1509
        %v1517 = vpack.c.b16 %v1512, %v1511
        %v1518 = vpack.c.b16 %v1514, %v1513
        %vm1523 = vcmask 523264
        %v1525 = vsel %vm1523, %v1483, 0
        %1527 = vmatprep.subr.bf16.mxu0 0
        %1528 = vmatpush1.bf16.msra.mxu0 %v1515
        %1529 = vmatprep.subr.bf16.mxu0 0
        %1530 = vmatpush1.bf16.msra.mxu0 %v1516
        %1531 = vmatprep.subr.bf16.mxu0 0
        %1532 = vmatpush1.bf16.msra.mxu0 %v1517
        %1533 = vmatprep.subr.bf16.mxu0 0
        %1534 = vmatpush1.bf16.msra.mxu0 %v1518
        %1535 = vmatprep.subr.bf16.mxu0 0
        %1536 = vmatpush1.bf16.msra.mxu0 0
        %1537 = vmatprep.subr.bf16.mxu0 0
        %1538 = vmatpush1.bf16.msra.mxu0 0
        %1539 = vmatprep.subr.bf16.mxu0 0
        %1540 = vmatpush1.bf16.msra.mxu0 0
        %1541 = vmatprep.subr.bf16.mxu0 0
        %1542 = vmatpush1.bf16.msra.mxu0 0
        %1543 = vmatprep.subr.bf16.mxu0 0
        %1544 = vmatpush1.bf16.msra.mxu0 0
        %1545 = vmatprep.subr.bf16.mxu0 0
        %1546 = vmatpush1.bf16.msra.mxu0 0
        %1547 = vmatprep.subr.bf16.mxu0 0
        %1548 = vmatpush1.bf16.msra.mxu0 0
        %1549 = vmatprep.subr.bf16.mxu0 0
        %1550 = vmatpush1.bf16.msra.mxu0 0
        %1551 = vmatprep.subr.bf16.mxu0 0
        %1552 = vmatpush1.bf16.msra.mxu0 0
        %1553 = vmatprep.subr.bf16.mxu0 0
        %1554 = vmatpush1.bf16.msra.mxu0 0
        %1555 = vmatprep.subr.bf16.mxu0 0
        %1556 = vmatpush1.bf16.msra.mxu0 0
        %1557 = vmatprep.subr.bf16.mxu0 0
        %1558 = vmatpush1.bf16.msra.mxu0 0
        %1559 = vmatprep.mubr.bf16.mxu0 0
        %1560 = vmatmul.mubr.bf16.gmra.mrb[0].mxu0 %v1525
        %v1561 = vpop.f32.mrb[0].mxu0
        %v1562 = vadd.f32 %v1497, %v1561
        %v1563 = vpop.f32.mrb[0].mxu0
        %v1564 = vpop.f32.mrb[0].mxu0
        %v1565 = vpop.f32.mrb[0].mxu0
        %1566 = vdwg.mxu0
        %v1567 = vadd.f32 %v1562, %v1381
        %1568 = vst.msk [vmem:[%s706] sm:$0xff] %vm741, %v1567
        %s1569 = sand.u32 %s370, 1
        %s1570 = scalar_lea.sflag [#allocation4], %s1569
        %s1571 = sand.u32 %s370, 1
        %s1572 = smul.addr %s1571, 8
        %s1573 = scalar_lea.vmem [#allocation14], %s1572
        // Predicated region
        $region101: #{transformer_forward.1} parent=67 // pred_check
          %p1574 = pneg %p380
        $region102: #{transformer_forward.1} parent=67 // pred_check_branch
          %1576 = sbr.rel (%p1574) target = $region104
        $region103: #{transformer_forward.1} parent=67 // pred_region
          %s1578 = ssub.s32 128, 128
          %1579 = vsyncadd %s1570, %s1578
          %s1580 = smul.addr %s42, 128
          %s1581 = scalar_lea.hbm %s12, %s1580
          %s1583 = sshll.u32 %s1573, 4
          %s1584 = int_to_ptr.vmem [resolvable:$true] %s1583
          %1586 = dma.vmem_to_hbm [thread:$0]  %s1584, 128, %s1581, %s1570
        $region104: #{transformer_forward.1} parent=67 // pred_fallthru
          _
      $region68: #{transformer_forward.1} parent=5 // pred_fallthru
        _
      %p1587 = scmp.le.s32.totalorder 2, %s33
      // Predicated region
      $region105: #{transformer_forward.1} parent=5 // pred_check
        %p1588 = pneg %p1587
      $region106: #{transformer_forward.1} parent=5 // pred_check_branch
        %1590 = sbr.rel (%p1588) target = $region108
      $region107: #{transformer_forward.1} parent=5 // pred_region
        %s1591 = ssub.s32 %s33, 2
        // Predicated region
        $region109: #{transformer_forward.1} parent=107 // pred_check
          %p1592 = pneg %p386
        $region110: #{transformer_forward.1} parent=107 // pred_check_branch
          %1594 = sbr.rel (%p1592) target = $region112
        $region111: #{transformer_forward.1} parent=107 // pred_region
          %s1595 = sand.u32 %s371, 1
          %s1596 = scalar_lea.sflag [#allocation4], %s1595
          %s1597 = sand.u32 %s371, 1
          %s1598 = smul.addr %s1597, 8
          %s1599 = scalar_lea.vmem [#allocation14], %s1598
          %1600 = dma.done %s1596, 128
        $region112: #{transformer_forward.1} parent=107 // pred_fallthru
          _
      $region108: #{transformer_forward.1} parent=5 // pred_fallthru
        _
    $region6: #{transformer_forward.1} parent=1 // loop_footer
      %s37 = sadd.s32 1, %s33
    $region7: #{transformer_forward.1} parent=1 // loop_footer_branch
      %32 = sbr.rel target = $region3
    $region8: #{transformer_forward.1} parent=1 // loop_exit
      _
    %1601 = vsyncpa [#allocation3], 1
    %s1602 = scalar_lea.sflag [#allocation3], 1
    %1603 = vsyncpa %s1602, 1
    %1604 = vsyncpa [#allocation6], 1
    %s1605 = scalar_lea.sflag [#allocation6], 1
    %1606 = vsyncpa %s1605, 1
    %1607 = vsyncpa [#allocation9], 1
    %s1608 = scalar_lea.sflag [#allocation9], 1
    %1609 = vsyncpa %s1608, 1
    %1610 = vsyncpa [#allocation12], 1
    %s1611 = scalar_lea.sflag [#allocation12], 1
    %1612 = vsyncpa %s1611, 1
    %1613 = vsyncpa [#allocation4], 1
    %s1614 = scalar_lea.sflag [#allocation4], 1
    %1615 = vsyncpa %s1614, 1

</llo_original>
